<compile_context>
chip_gen: v6e
topology: v6e:2x2x1
jax: 0.10.0
libtpu: 0.0.40
codegen_flags: <defaults>
</compile_context>

<pallas_src>
import math

import jax
import jax.numpy as jnp
from jax.experimental import pallas as pl
from jax.experimental.pallas import tpu as pltpu

LANE = 128


def _round_up(n, m):
    return ((n + m - 1) // m) * m


def _round_down(n, m):
    return (n // m) * m


def _vmem_capacity_bytes():
    """Physical VMEM per TensorCore, with a generation-aware fallback."""
    try:
        info = pltpu.get_tpu_info()
        for name in ("vmem_capacity_bytes", "vmem_bytes", "vmem_size_bytes"):
            v = getattr(info, name, None)
            if v:
                return int(v)
    except Exception:
        pass
    try:
        kind = jax.devices()[0].device_kind.lower()
        if "v7" in kind:
            return 64 * 1024 * 1024            # v7x: 64 MiB / TC
    except Exception:
        pass
    return 128 * 1024 * 1024                   # v5e / v6e: 128 MiB


def fold_classifier_weight(w, hw, dtype):
    """Fold the global average pool into the Linear weight.

    mean_s(x) @ W  ==  x_flat @ (repeat(W, HW, axis=0) / HW)

    Pure constant work -- call once per weight, NOT per forward.
    """
    w = jnp.asarray(w, jnp.float32)
    return (jnp.repeat(w, hw, axis=0) / float(hw)).astype(dtype)


def _head_kernel(x_ref, w_ref, b_ref, o_ref, acc_ref):
    # x_ref:   (tb, tk)     streamed activation tile (native dtype, e.g. bf16)
    # w_ref:   (tk, n_cls)  pool-folded weight K-tile
    # b_ref:   (1, n_cls)   f32 bias
    # o_ref:   (tb, n_cls)  f32 sigmoid probabilities (written on last K step)
    # acc_ref: (tb, n_cls)  f32 accumulator, resident across the K axis
    k = pl.program_id(1)

    @pl.when(k == 0)
    def _():
        acc_ref[...] = jnp.zeros_like(acc_ref)

    acc_ref[...] += jnp.dot(x_ref[...], w_ref[...],
                            preferred_element_type=jnp.float32)

    @pl.when(k == pl.num_programs(1) - 1)
    def _():
        z = acc_ref[...] + b_ref[...]
        # sigmoid = 1/(1 + exp(-z)); exp and approx reciprocal both go to the EUP.
        o_ref[...] = pl.reciprocal(1.0 + jnp.exp(-z), approx=True)


def _select_tiles(B, CHW, itemsize, vmem_limit):
    sub = {1: 32, 2: 16}.get(itemsize, 8)      # dtype sublane-packing multiple

    # K tile: must divide CHW exactly (no partial contraction blocks) and be a
    # multiple of 128 lanes (or the full extent).  ~8K elements keeps the
    # double-buffered lane-padded weight buffer at ~4 MiB (bf16) independent
    # of the backbone width.
    tk = CHW
    if CHW % LANE == 0:
        t = min(_round_down(CHW, LANE), 8 * 1024)
        while t >= LANE:
            if CHW % t == 0:
                tk = t
                break
            t -= LANE

    # Batch tile from remaining VMEM.  Buffers are lane-padded to 128 and
    # double-buffered where streamed:
    #   weight: 2 * tk * 128 * itemsize
    #   x tile: 2 * tb * tk * itemsize
    #   acc + output (f32): 3 * tb * 128 * 4
    w_vmem = 2 * tk * LANE * itemsize
    slack = 2 * 1024 * 1024
    rem = max(vmem_limit - w_vmem - slack, vmem_limit // 8)
    per_row = 2 * tk * itemsize + 3 * LANE * 4
    tb = max(sub, min(512, _round_down(rem // per_row, sub)))

    if B <= sub:
        tb = B                                 # full-extent block on tiny batches
    else:
        tb = min(tb, _round_down(B, sub))
        # Keep >=2 batch grid steps when possible: v7x's two TensorCores only
        # split work along the "parallel" grid axis.
        if tb >= B and B >= 2 * sub:
            tb = max(sub, _round_up(-(-B // 2), sub))
    return tb, tk


def inception_head(x_nchw, w_folded, b, *, tb=None, tk=None):
    """Global-avg-pool + Linear(num_ftrs, 14) + Sigmoid over backbone features.

    x_nchw:   (B, C, H, W) backbone feature maps (streamed in native dtype)
    w_folded: (C*H*W, 14)  pool-folded weight from fold_classifier_weight()
    b:        (14,)        classifier bias
    returns   (B, 14) float32 sigmoid probabilities
    """
    B, C, H, W = x_nchw.shape
    CHW = C * H * W
    n_cls = w_folded.shape[-1]
    itemsize = jnp.dtype(x_nchw.dtype).itemsize
    assert w_folded.shape[0] == CHW

    vmem_limit = min(int(_vmem_capacity_bytes() * 3 // 4), 100 * 1024 * 1024)

    auto_tb, auto_tk = _select_tiles(B, CHW, itemsize, vmem_limit)
    tb = int(tb or auto_tb)
    tk = int(tk or auto_tk)

    x2 = x_nchw.reshape(B, CHW)                # layout-preserving, no HBM copy
    b2 = jnp.asarray(b, jnp.float32).reshape(1, n_cls)

    n_btiles = pl.cdiv(B, tb)
    n_ktiles = CHW // tk

    cost = pl.CostEstimate(
        flops=2 * B * CHW * n_cls,
        transcendentals=B * n_cls,
        bytes_accessed=(B * CHW * itemsize                    # activations
                        + n_btiles * CHW * n_cls * itemsize   # weight per batch tile
                        + B * n_cls * 4 + n_cls * 4),
    )

    out = pl.pallas_call(
        _head_kernel,
        out_shape=jax.ShapeDtypeStruct((B, n_cls), jnp.float32),
        grid_spec=pltpu.PrefetchScalarGridSpec(
            num_scalar_prefetch=0,
            grid=(n_btiles, n_ktiles),
            in_specs=[
                pl.BlockSpec((tb, tk), lambda i, k: (i, k)),      # streamed x
                pl.BlockSpec((tk, n_cls), lambda i, k: (k, 0)),   # weight K-tile
                pl.BlockSpec((1, n_cls), lambda i, k: (0, 0)),    # bias
            ],
            out_specs=pl.BlockSpec((tb, n_cls), lambda i, k: (i, 0)),
            scratch_shapes=[pltpu.VMEM((tb, n_cls), jnp.float32)],
        ),
        compiler_params=pltpu.CompilerParams(
            dimension_semantics=("parallel", "arbitrary"),
            vmem_limit_bytes=vmem_limit,
        ),
        cost_estimate=cost,
    )(x2, w_folded, b2)
    return out


if __name__ == "__main__":
    key = jax.random.PRNGKey(0)
    kx, kw, kb = jax.random.split(key, 3)

    # Small shapes consistent with the module: B=2 backbone feature maps with
    # num_ftrs (=C) = 64 channels over an 8x8 spatial grid, 14 output classes.
    B, C, H, W = 2, 64, 8, 8
    NUM_CLASSES = 14

    # Backbone output kept in bf16 — the kernel streams it without up-casting.
    x = jax.random.normal(kx, (B, C, H, W), dtype=jnp.float32).astype(jnp.bfloat16)

    # Deterministic nn.Linear(num_ftrs, 14) default init: U(-1/sqrt(in), 1/sqrt(in)).
    bound = 1.0 / math.sqrt(C)
    w = jax.random.uniform(kw, (C, NUM_CLASSES), jnp.float32, -bound, bound)
    b = jax.random.uniform(kb, (NUM_CLASSES,), jnp.float32, -bound, bound)

    # Pool-fold is constant per weight: pay it once, outside the forward path.
    w_folded = fold_classifier_weight(w, hw=H * W, dtype=x.dtype)

    out = jax.block_until_ready(inception_head(x, w_folded, b))

    # Pure-JAX reference of the same forward semantics (f32 math on the same
    # bf16 feature values).
    ref = jax.nn.sigmoid(x.astype(jnp.float32).mean(axis=(2, 3)) @ w + b)
    assert out.shape == (B, NUM_CLASSES)
    assert jnp.allclose(out, ref, atol=2e-2, rtol=2e-2), "mismatch vs reference"

    print("KERNEL_OK")
</pallas_src>

<mosaic_0001>
module attributes {stable_mosaic.version = 11 : i64} {
  func.func @_head_kernel(%arg0: i32, %arg1: i32, %arg2: memref<2x4096xbf16, #tpu.memory_space<vmem>>, %arg3: memref<4096x14xbf16, #tpu.memory_space<vmem>>, %arg4: memref<1x14xf32, #tpu.memory_space<vmem>>, %arg5: memref<2x14xf32, #tpu.memory_space<vmem>>, %arg6: memref<2x14xf32, #tpu.memory_space<vmem>>) attributes {dimension_semantics = [#tpu.dimension_semantics<parallel>, #tpu.dimension_semantics<arbitrary>], iteration_bounds = array<i64: 1, 1>, scalar_prefetch = 0 : i64, scratch_operands = 1 : i64, tpu.core_type = #tpu.core_type<tc>, window_params = [{transform_indices = @transform_0, window_bounds = array<i64: 2, 4096>}, {transform_indices = @transform_1, window_bounds = array<i64: 4096, 14>}, {pipeline_mode = #tpu.pipeline_mode<synchronous>, transform_indices = @transform_2, window_bounds = array<i64: 1, 14>}, {transform_indices = @transform_3, window_bounds = array<i64: 2, 14>}]} {
    %c0_i32 = arith.constant 0 : i32
    %0 = arith.cmpi eq, %arg1, %c0_i32 : i32
    %1 = arith.extui %0 : i1 to i32
    %c0_i32_0 = arith.constant 0 : i32
    %2 = arith.cmpi ne, %1, %c0_i32_0 : i32
    scf.if %2 {
      %cst_10 = arith.constant 0.000000e+00 : f32
      %12 = vector.broadcast %cst_10 : f32 to vector<2x14xf32>
      %c0_11 = arith.constant 0 : index
      %c0_12 = arith.constant 0 : index
      %13 = vector.load %arg6[%c0_11, %c0_12] : memref<2x14xf32, #tpu.memory_space<vmem>>, vector<2x14xf32>
      tpu.vector_store %arg6[%c0_11, %c0_12], %12 {strides = array<i32>} : memref<2x14xf32, #tpu.memory_space<vmem>>, vector<2x14xf32>,
    } else {
    }
    %c0 = arith.constant 0 : index
    %c0_1 = arith.constant 0 : index
    %3 = vector.load %arg6[%c0, %c0_1] : memref<2x14xf32, #tpu.memory_space<vmem>>, vector<2x14xf32>
    %c0_2 = arith.constant 0 : index
    %c0_3 = arith.constant 0 : index
    %4 = vector.load %arg2[%c0_2, %c0_3] : memref<2x4096xbf16, #tpu.memory_space<vmem>>, vector<2x4096xbf16>
    %c0_4 = arith.constant 0 : index
    %c0_5 = arith.constant 0 : index
    %5 = vector.load %arg3[%c0_4, %c0_5] : memref<4096x14xbf16, #tpu.memory_space<vmem>>, vector<4096x14xbf16>
    %cst = arith.constant dense<0.000000e+00> : vector<2x14xf32>
    %6 = tpu.matmul %4, %5, %cst {dimension_numbers = #tpu.dot_dimension_numbers<[1], [0], [0], [1], [0, 0, 1, 1], [], []>} : vector<2x4096xbf16>, vector<4096x14xbf16>, vector<2x14xf32> -> vector<2x14xf32>
    %7 = arith.addf %3, %6 : vector<2x14xf32>
    %c0_6 = arith.constant 0 : index
    %c0_7 = arith.constant 0 : index
    %8 = vector.load %arg6[%c0_6, %c0_7] : memref<2x14xf32, #tpu.memory_space<vmem>>, vector<2x14xf32>
    tpu.vector_store %arg6[%c0_6, %c0_7], %7 {strides = array<i32>} : memref<2x14xf32, #tpu.memory_space<vmem>>, vector<2x14xf32>,
    %c0_i32_8 = arith.constant 0 : i32
    %9 = arith.cmpi eq, %arg1, %c0_i32_8 : i32
    %10 = arith.extui %9 : i1 to i32
    %c0_i32_9 = arith.constant 0 : i32
    %11 = arith.cmpi ne, %10, %c0_i32_9 : i32
    scf.if %11 {
      %c0_10 = arith.constant 0 : index
      %c0_11 = arith.constant 0 : index
      %12 = vector.load %arg6[%c0_10, %c0_11] : memref<2x14xf32, #tpu.memory_space<vmem>>, vector<2x14xf32>
      %c0_12 = arith.constant 0 : index
      %c0_13 = arith.constant 0 : index
      %13 = vector.load %arg4[%c0_12, %c0_13] : memref<1x14xf32, #tpu.memory_space<vmem>>, vector<1x14xf32>
      %14 = vector.broadcast %13 : vector<1x14xf32> to vector<2x14xf32>
      %15 = arith.addf %12, %14 : vector<2x14xf32>
      %cst_14 = arith.constant 0.000000e+00 : f32
      %16 = vector.broadcast %cst_14 : f32 to vector<2x14xf32>
      %17 = arith.subf %16, %15 : vector<2x14xf32>
      %18 = math.exp %17 : vector<2x14xf32>
      %cst_15 = arith.constant 1.000000e+00 : f32
      %19 = vector.broadcast %cst_15 : f32 to vector<2x14xf32>
      %20 = arith.addf %19, %18 : vector<2x14xf32>
      %21 = tpu.reciprocal %20 {approx = true} : vector<2x14xf32> -> vector<2x14xf32>
      %c0_16 = arith.constant 0 : index
      %c0_17 = arith.constant 0 : index
      %22 = vector.load %arg5[%c0_16, %c0_17] : memref<2x14xf32, #tpu.memory_space<vmem>>, vector<2x14xf32>
      tpu.vector_store %arg5[%c0_16, %c0_17], %21 {strides = array<i32>} : memref<2x14xf32, #tpu.memory_space<vmem>>, vector<2x14xf32>,
    } else {
    }
    return
  }
  func.func @transform_0(%arg0: i32, %arg1: i32) -> (i32, i32) {
    %c0_i32 = arith.constant 0 : i32
    return %arg0, %arg1 : i32, i32
  }
  func.func @transform_1(%arg0: i32, %arg1: i32) -> (i32, i32) {
    %c0_i32 = arith.constant 0 : i32
    %c0_i32_0 = arith.constant 0 : i32
    return %arg1, %c0_i32 : i32, i32
  }
  func.func @transform_2(%arg0: i32, %arg1: i32) -> (i32, i32) {
    %c0_i32 = arith.constant 0 : i32
    %c0_i32_0 = arith.constant 0 : i32
    %c0_i32_1 = arith.constant 0 : i32
    return %c0_i32, %c0_i32_0 : i32, i32
  }
  func.func @transform_3(%arg0: i32, %arg1: i32) -> (i32, i32) {
    %c0_i32 = arith.constant 0 : i32
    %c0_i32_0 = arith.constant 0 : i32
    return %arg0, %c0_i32 : i32, i32
  }
}

</mosaic_0001>

<llo_original>
// kernel: tpu_custom_call.1
$region0: #{tpu_custom_call.1}
  #allocation0 [shape = 'u32[]', space=smem, size = 0x4, offset = 0x4, fixed_abs, tag = 'smem constant byte address 0x4 - core index']
  #allocation1 [shape = 'u32[144,128]{1,0:T(1,128)}', space=vmem, size = 0x12000, scoped, tag = 'internal scratch']
  #allocation2 [shape = 'f32[2,14]{1,0:T(2,128)}', space=vmem, size = 0x400, scoped, tag = 'scratch operand']
  %s0 = inlined_call_operand.vmem [shape: bf16[2,4096], index: 0, kind: input, shape index: {}]
  %s1 = inlined_call_operand.vmem [shape: bf16[4096,14], index: 1, kind: input, shape index: {}]
  %s2 = inlined_call_operand.vmem [shape: f32[1,14], index: 2, kind: input, shape index: {}]
  %s3 = inlined_call_operand.hbm [shape: f32[2,14], index: 3, kind: output, shape index: {}]
  %s4 = sld [smem:[#allocation0]]
  $region30: #{tpu_custom_call.1} parent=0
    _
  %s6 = ssub.s32 1, %s4
  %s7 = scalar_select 0, %s6, %s4
  $region1: #{tpu_custom_call.1} parent=0
    #allocation3 [shape = 'u8[1024]{0}', space=vmem, size = 0x400, scoped, tag = 'output window, operand 0, single buffered']
    #allocation4 [shape = 's32[1]{0}', space=sflag, size = 0x4, scoped, tag = 'scoped memory for tpu_custom_call.1']
    %8 = vsyncpa [#allocation4], 0
    // Predicated region
    $region2: #{tpu_custom_call.1} parent=1 // pred_check
      _
    $region3: #{tpu_custom_call.1} parent=1 // pred_check_branch
      %10 = sbr.rel (0) target = $region5
    $region4: #{tpu_custom_call.1} parent=1 // pred_region
      _
    $region5: #{tpu_custom_call.1} parent=1 // pred_fallthru
      _
    // Predicated region
    $region6: #{tpu_custom_call.1} parent=1 // pred_check
      _
    $region7: #{tpu_custom_call.1} parent=1 // pred_check_branch
      %12 = sbr.rel (0) target = $region9
    $region8: #{tpu_custom_call.1} parent=1 // pred_region
      _
    $region9: #{tpu_custom_call.1} parent=1 // pred_fallthru
      _
    // Predicated region
    $region10: #{tpu_custom_call.1} parent=1 // pred_check
      _
    $region11: #{tpu_custom_call.1} parent=1 // pred_check_branch
      %14 = sbr.rel (0) target = $region13
    $region12: #{tpu_custom_call.1} parent=1 // pred_region
      _
    $region13: #{tpu_custom_call.1} parent=1 // pred_fallthru
      _
    %p16 = scmp.eq.s32.totalorder 0, 0
    // Predicated region
    $region14: #{tpu_custom_call.1} parent=1 // pred_check
      %p17 = pneg %p16
    $region15: #{tpu_custom_call.1} parent=1 // pred_check_branch
      %19 = sbr.rel (%p17) target = $region17
    $region16: #{tpu_custom_call.1} parent=1 // pred_region
      %vm20 = vcmask 107520
      %21 = vst.msk [vmem:[#allocation2] sm:$0x3] %vm20, 0.0
    $region17: #{tpu_custom_call.1} parent=1 // pred_fallthru
      _
    %v22 = vld [vmem:[#allocation2] sm:$0x3]
    %v23 = vld [vmem:[%s0] sm:$0xff]
    %v24 = vld [vmem:[%s0 + $0x8] sm:$0xff]
    %v25 = vld [vmem:[%s0 + $0x10] sm:$0xff]
    %v26 = vld [vmem:[%s0 + $0x18] sm:$0xff]
    %v27 = vld [vmem:[%s1] sm:$0xf]
    %v28 = vld [vmem:[%s1 + $0x4] sm:$0xf]
    %v29 = vld [vmem:[%s1 + $0x8] sm:$0xf]
    %v30 = vld [vmem:[%s1 + $0xc] sm:$0xf]
    %v31 = vld [vmem:[%s1 + $0x10] sm:$0xf]
    %v32 = vld [vmem:[%s1 + $0x14] sm:$0xf]
    %v33 = vld [vmem:[%s1 + $0x18] sm:$0xf]
    %v34 = vld [vmem:[%s1 + $0x1c] sm:$0xf]
    %v35 = vld [vmem:[%s1 + $0x20] sm:$0xf]
    %v36 = vld [vmem:[%s1 + $0x24] sm:$0xf]
    %v37 = vld [vmem:[%s1 + $0x28] sm:$0xf]
    %v38 = vld [vmem:[%s1 + $0x2c] sm:$0xf]
    %v39 = vld [vmem:[%s1 + $0x30] sm:$0xf]
    %v40 = vld [vmem:[%s1 + $0x34] sm:$0xf]
    %v41 = vld [vmem:[%s1 + $0x38] sm:$0xf]
    %v42 = vld [vmem:[%s1 + $0x3c] sm:$0xf]
    %v43 = vld [vmem:[%s1 + $0x40] sm:$0xf]
    %v44 = vld [vmem:[%s1 + $0x44] sm:$0xf]
    %v45 = vld [vmem:[%s1 + $0x48] sm:$0xf]
    %v46 = vld [vmem:[%s1 + $0x4c] sm:$0xf]
    %v47 = vld [vmem:[%s1 + $0x50] sm:$0xf]
    %v48 = vld [vmem:[%s1 + $0x54] sm:$0xf]
    %v49 = vld [vmem:[%s1 + $0x58] sm:$0xf]
    %v50 = vld [vmem:[%s1 + $0x5c] sm:$0xf]
    %v51 = vld [vmem:[%s1 + $0x60] sm:$0xf]
    %v52 = vld [vmem:[%s1 + $0x64] sm:$0xf]
    %v53 = vld [vmem:[%s1 + $0x68] sm:$0xf]
    %v54 = vld [vmem:[%s1 + $0x6c] sm:$0xf]
    %v55 = vld [vmem:[%s1 + $0x70] sm:$0xf]
    %v56 = vld [vmem:[%s1 + $0x74] sm:$0xf]
    %v57 = vld [vmem:[%s1 + $0x78] sm:$0xf]
    %v58 = vld [vmem:[%s1 + $0x7c] sm:$0xf]
    %v59 = vld [vmem:[%s1 + $0x80] sm:$0xf]
    %v60 = vld [vmem:[%s1 + $0x84] sm:$0xf]
    %v61 = vld [vmem:[%s1 + $0x88] sm:$0xf]
    %v62 = vld [vmem:[%s1 + $0x8c] sm:$0xf]
    %v63 = vld [vmem:[%s1 + $0x90] sm:$0xf]
    %v64 = vld [vmem:[%s1 + $0x94] sm:$0xf]
    %v65 = vld [vmem:[%s1 + $0x98] sm:$0xf]
    %v66 = vld [vmem:[%s1 + $0x9c] sm:$0xf]
    %v67 = vld [vmem:[%s1 + $0xa0] sm:$0xf]
    %v68 = vld [vmem:[%s1 + $0xa4] sm:$0xf]
    %v69 = vld [vmem:[%s1 + $0xa8] sm:$0xf]
    %v70 = vld [vmem:[%s1 + $0xac] sm:$0xf]
    %v71 = vld [vmem:[%s1 + $0xb0] sm:$0xf]
    %v72 = vld [vmem:[%s1 + $0xb4] sm:$0xf]
    %v73 = vld [vmem:[%s1 + $0xb8] sm:$0xf]
    %v74 = vld [vmem:[%s1 + $0xbc] sm:$0xf]
    %v75 = vld [vmem:[%s1 + $0xc0] sm:$0xf]
    %v76 = vld [vmem:[%s1 + $0xc4] sm:$0xf]
    %v77 = vld [vmem:[%s1 + $0xc8] sm:$0xf]
    %v78 = vld [vmem:[%s1 + $0xcc] sm:$0xf]
    %v79 = vld [vmem:[%s1 + $0xd0] sm:$0xf]
    %v80 = vld [vmem:[%s1 + $0xd4] sm:$0xf]
    %v81 = vld [vmem:[%s1 + $0xd8] sm:$0xf]
    %v82 = vld [vmem:[%s1 + $0xdc] sm:$0xf]
    %v83 = vld [vmem:[%s1 + $0xe0] sm:$0xf]
    %v84 = vld [vmem:[%s1 + $0xe4] sm:$0xf]
    %v85 = vld [vmem:[%s1 + $0xe8] sm:$0xf]
    %v86 = vld [vmem:[%s1 + $0xec] sm:$0xf]
    %v87 = vld [vmem:[%s1 + $0xf0] sm:$0xf]
    %v88 = vld [vmem:[%s1 + $0xf4] sm:$0xf]
    %v89 = vld [vmem:[%s1 + $0xf8] sm:$0xf]
    %v90 = vld [vmem:[%s1 + $0xfc] sm:$0xf]
    %v91 = vld [vmem:[%s1 + $0x100] sm:$0xf]
    %v92 = vld [vmem:[%s1 + $0x104] sm:$0xf]
    %v93 = vld [vmem:[%s1 + $0x108] sm:$0xf]
    %v94 = vld [vmem:[%s1 + $0x10c] sm:$0xf]
    %v95 = vld [vmem:[%s1 + $0x110] sm:$0xf]
    %v96 = vld [vmem:[%s1 + $0x114] sm:$0xf]
    %v97 = vld [vmem:[%s1 + $0x118] sm:$0xf]
    %v98 = vld [vmem:[%s1 + $0x11c] sm:$0xf]
    %v99 = vld [vmem:[%s1 + $0x120] sm:$0xf]
    %v100 = vld [vmem:[%s1 + $0x124] sm:$0xf]
    %v101 = vld [vmem:[%s1 + $0x128] sm:$0xf]
    %v102 = vld [vmem:[%s1 + $0x12c] sm:$0xf]
    %v103 = vld [vmem:[%s1 + $0x130] sm:$0xf]
    %v104 = vld [vmem:[%s1 + $0x134] sm:$0xf]
    %v105 = vld [vmem:[%s1 + $0x138] sm:$0xf]
    %v106 = vld [vmem:[%s1 + $0x13c] sm:$0xf]
    %v107 = vld [vmem:[%s1 + $0x140] sm:$0xf]
    %v108 = vld [vmem:[%s1 + $0x144] sm:$0xf]
    %v109 = vld [vmem:[%s1 + $0x148] sm:$0xf]
    %v110 = vld [vmem:[%s1 + $0x14c] sm:$0xf]
    %v111 = vld [vmem:[%s1 + $0x150] sm:$0xf]
    %v112 = vld [vmem:[%s1 + $0x154] sm:$0xf]
    %v113 = vld [vmem:[%s1 + $0x158] sm:$0xf]
    %v114 = vld [vmem:[%s1 + $0x15c] sm:$0xf]
    %v115 = vld [vmem:[%s1 + $0x160] sm:$0xf]
    %v116 = vld [vmem:[%s1 + $0x164] sm:$0xf]
    %v117 = vld [vmem:[%s1 + $0x168] sm:$0xf]
    %v118 = vld [vmem:[%s1 + $0x16c] sm:$0xf]
    %v119 = vld [vmem:[%s1 + $0x170] sm:$0xf]
    %v120 = vld [vmem:[%s1 + $0x174] sm:$0xf]
    %v121 = vld [vmem:[%s1 + $0x178] sm:$0xf]
    %v122 = vld [vmem:[%s1 + $0x17c] sm:$0xf]
    %v123 = vld [vmem:[%s1 + $0x180] sm:$0xf]
    %v124 = vld [vmem:[%s1 + $0x184] sm:$0xf]
    %v125 = vld [vmem:[%s1 + $0x188] sm:$0xf]
    %v126 = vld [vmem:[%s1 + $0x18c] sm:$0xf]
    %v127 = vld [vmem:[%s1 + $0x190] sm:$0xf]
    %v128 = vld [vmem:[%s1 + $0x194] sm:$0xf]
    %v129 = vld [vmem:[%s1 + $0x198] sm:$0xf]
    %v130 = vld [vmem:[%s1 + $0x19c] sm:$0xf]
    %v131 = vld [vmem:[%s1 + $0x1a0] sm:$0xf]
    %v132 = vld [vmem:[%s1 + $0x1a4] sm:$0xf]
    %v133 = vld [vmem:[%s1 + $0x1a8] sm:$0xf]
    %v134 = vld [vmem:[%s1 + $0x1ac] sm:$0xf]
    %v135 = vld [vmem:[%s1 + $0x1b0] sm:$0xf]
    %v136 = vld [vmem:[%s1 + $0x1b4] sm:$0xf]
    %v137 = vld [vmem:[%s1 + $0x1b8] sm:$0xf]
    %v138 = vld [vmem:[%s1 + $0x1bc] sm:$0xf]
    %v139 = vld [vmem:[%s1 + $0x1c0] sm:$0xf]
    %v140 = vld [vmem:[%s1 + $0x1c4] sm:$0xf]
    %v141 = vld [vmem:[%s1 + $0x1c8] sm:$0xf]
    %v142 = vld [vmem:[%s1 + $0x1cc] sm:$0xf]
    %v143 = vld [vmem:[%s1 + $0x1d0] sm:$0xf]
    %v144 = vld [vmem:[%s1 + $0x1d4] sm:$0xf]
    %v145 = vld [vmem:[%s1 + $0x1d8] sm:$0xf]
    %v146 = vld [vmem:[%s1 + $0x1dc] sm:$0xf]
    %v147 = vld [vmem:[%s1 + $0x1e0] sm:$0xf]
    %v148 = vld [vmem:[%s1 + $0x1e4] sm:$0xf]
    %v149 = vld [vmem:[%s1 + $0x1e8] sm:$0xf]
    %v150 = vld [vmem:[%s1 + $0x1ec] sm:$0xf]
    %v151 = vld [vmem:[%s1 + $0x1f0] sm:$0xf]
    %v152 = vld [vmem:[%s1 + $0x1f4] sm:$0xf]
    %v153 = vld [vmem:[%s1 + $0x1f8] sm:$0xf]
    %v154 = vld [vmem:[%s1 + $0x1fc] sm:$0xf]
    %v155 = vld [vmem:[%s1 + $0x200] sm:$0xf]
    %v156 = vld [vmem:[%s1 + $0x204] sm:$0xf]
    %v157 = vld [vmem:[%s1 + $0x208] sm:$0xf]
    %v158 = vld [vmem:[%s1 + $0x20c] sm:$0xf]
    %v159 = vld [vmem:[%s1 + $0x210] sm:$0xf]
    %v160 = vld [vmem:[%s1 + $0x214] sm:$0xf]
    %v161 = vld [vmem:[%s1 + $0x218] sm:$0xf]
    %v162 = vld [vmem:[%s1 + $0x21c] sm:$0xf]
    %v163 = vld [vmem:[%s1 + $0x220] sm:$0xf]
    %v164 = vld [vmem:[%s1 + $0x224] sm:$0xf]
    %v165 = vld [vmem:[%s1 + $0x228] sm:$0xf]
    %v166 = vld [vmem:[%s1 + $0x22c] sm:$0xf]
    %v167 = vld [vmem:[%s1 + $0x230] sm:$0xf]
    %v168 = vld [vmem:[%s1 + $0x234] sm:$0xf]
    %v169 = vld [vmem:[%s1 + $0x238] sm:$0xf]
    %v170 = vld [vmem:[%s1 + $0x23c] sm:$0xf]
    %v171 = vld [vmem:[%s1 + $0x240] sm:$0xf]
    %v172 = vld [vmem:[%s1 + $0x244] sm:$0xf]
    %v173 = vld [vmem:[%s1 + $0x248] sm:$0xf]
    %v174 = vld [vmem:[%s1 + $0x24c] sm:$0xf]
    %v175 = vld [vmem:[%s1 + $0x250] sm:$0xf]
    %v176 = vld [vmem:[%s1 + $0x254] sm:$0xf]
    %v177 = vld [vmem:[%s1 + $0x258] sm:$0xf]
    %v178 = vld [vmem:[%s1 + $0x25c] sm:$0xf]
    %v179 = vld [vmem:[%s1 + $0x260] sm:$0xf]
    %v180 = vld [vmem:[%s1 + $0x264] sm:$0xf]
    %v181 = vld [vmem:[%s1 + $0x268] sm:$0xf]
    %v182 = vld [vmem:[%s1 + $0x26c] sm:$0xf]
    %v183 = vld [vmem:[%s1 + $0x270] sm:$0xf]
    %v184 = vld [vmem:[%s1 + $0x274] sm:$0xf]
    %v185 = vld [vmem:[%s1 + $0x278] sm:$0xf]
    %v186 = vld [vmem:[%s1 + $0x27c] sm:$0xf]
    %v187 = vld [vmem:[%s1 + $0x280] sm:$0xf]
    %v188 = vld [vmem:[%s1 + $0x284] sm:$0xf]
    %v189 = vld [vmem:[%s1 + $0x288] sm:$0xf]
    %v190 = vld [vmem:[%s1 + $0x28c] sm:$0xf]
    %v191 = vld [vmem:[%s1 + $0x290] sm:$0xf]
    %v192 = vld [vmem:[%s1 + $0x294] sm:$0xf]
    %v193 = vld [vmem:[%s1 + $0x298] sm:$0xf]
    %v194 = vld [vmem:[%s1 + $0x29c] sm:$0xf]
    %v195 = vld [vmem:[%s1 + $0x2a0] sm:$0xf]
    %v196 = vld [vmem:[%s1 + $0x2a4] sm:$0xf]
    %v197 = vld [vmem:[%s1 + $0x2a8] sm:$0xf]
    %v198 = vld [vmem:[%s1 + $0x2ac] sm:$0xf]
    %v199 = vld [vmem:[%s1 + $0x2b0] sm:$0xf]
    %v200 = vld [vmem:[%s1 + $0x2b4] sm:$0xf]
    %v201 = vld [vmem:[%s1 + $0x2b8] sm:$0xf]
    %v202 = vld [vmem:[%s1 + $0x2bc] sm:$0xf]
    %v203 = vld [vmem:[%s1 + $0x2c0] sm:$0xf]
    %v204 = vld [vmem:[%s1 + $0x2c4] sm:$0xf]
    %v205 = vld [vmem:[%s1 + $0x2c8] sm:$0xf]
    %v206 = vld [vmem:[%s1 + $0x2cc] sm:$0xf]
    %v207 = vld [vmem:[%s1 + $0x2d0] sm:$0xf]
    %v208 = vld [vmem:[%s1 + $0x2d4] sm:$0xf]
    %v209 = vld [vmem:[%s1 + $0x2d8] sm:$0xf]
    %v210 = vld [vmem:[%s1 + $0x2dc] sm:$0xf]
    %v211 = vld [vmem:[%s1 + $0x2e0] sm:$0xf]
    %v212 = vld [vmem:[%s1 + $0x2e4] sm:$0xf]
    %v213 = vld [vmem:[%s1 + $0x2e8] sm:$0xf]
    %v214 = vld [vmem:[%s1 + $0x2ec] sm:$0xf]
    %v215 = vld [vmem:[%s1 + $0x2f0] sm:$0xf]
    %v216 = vld [vmem:[%s1 + $0x2f4] sm:$0xf]
    %v217 = vld [vmem:[%s1 + $0x2f8] sm:$0xf]
    %v218 = vld [vmem:[%s1 + $0x2fc] sm:$0xf]
    %v219 = vld [vmem:[%s1 + $0x300] sm:$0xf]
    %v220 = vld [vmem:[%s1 + $0x304] sm:$0xf]
    %v221 = vld [vmem:[%s1 + $0x308] sm:$0xf]
    %v222 = vld [vmem:[%s1 + $0x30c] sm:$0xf]
    %v223 = vld [vmem:[%s1 + $0x310] sm:$0xf]
    %v224 = vld [vmem:[%s1 + $0x314] sm:$0xf]
    %v225 = vld [vmem:[%s1 + $0x318] sm:$0xf]
    %v226 = vld [vmem:[%s1 + $0x31c] sm:$0xf]
    %v227 = vld [vmem:[%s1 + $0x320] sm:$0xf]
    %v228 = vld [vmem:[%s1 + $0x324] sm:$0xf]
    %v229 = vld [vmem:[%s1 + $0x328] sm:$0xf]
    %v230 = vld [vmem:[%s1 + $0x32c] sm:$0xf]
    %v231 = vld [vmem:[%s1 + $0x330] sm:$0xf]
    %v232 = vld [vmem:[%s1 + $0x334] sm:$0xf]
    %v233 = vld [vmem:[%s1 + $0x338] sm:$0xf]
    %v234 = vld [vmem:[%s1 + $0x33c] sm:$0xf]
    %v235 = vld [vmem:[%s1 + $0x340] sm:$0xf]
    %v236 = vld [vmem:[%s1 + $0x344] sm:$0xf]
    %v237 = vld [vmem:[%s1 + $0x348] sm:$0xf]
    %v238 = vld [vmem:[%s1 + $0x34c] sm:$0xf]
    %v239 = vld [vmem:[%s1 + $0x350] sm:$0xf]
    %v240 = vld [vmem:[%s1 + $0x354] sm:$0xf]
    %v241 = vld [vmem:[%s1 + $0x358] sm:$0xf]
    %v242 = vld [vmem:[%s1 + $0x35c] sm:$0xf]
    %v243 = vld [vmem:[%s1 + $0x360] sm:$0xf]
    %v244 = vld [vmem:[%s1 + $0x364] sm:$0xf]
    %v245 = vld [vmem:[%s1 + $0x368] sm:$0xf]
    %v246 = vld [vmem:[%s1 + $0x36c] sm:$0xf]
    %v247 = vld [vmem:[%s1 + $0x370] sm:$0xf]
    %v248 = vld [vmem:[%s1 + $0x374] sm:$0xf]
    %v249 = vld [vmem:[%s1 + $0x378] sm:$0xf]
    %v250 = vld [vmem:[%s1 + $0x37c] sm:$0xf]
    %v251 = vld [vmem:[%s1 + $0x380] sm:$0xf]
    %v252 = vld [vmem:[%s1 + $0x384] sm:$0xf]
    %v253 = vld [vmem:[%s1 + $0x388] sm:$0xf]
    %v254 = vld [vmem:[%s1 + $0x38c] sm:$0xf]
    %v255 = vld [vmem:[%s1 + $0x390] sm:$0xf]
    %v256 = vld [vmem:[%s1 + $0x394] sm:$0xf]
    %v257 = vld [vmem:[%s1 + $0x398] sm:$0xf]
    %v258 = vld [vmem:[%s1 + $0x39c] sm:$0xf]
    %v259 = vld [vmem:[%s1 + $0x3a0] sm:$0xf]
    %v260 = vld [vmem:[%s1 + $0x3a4] sm:$0xf]
    %v261 = vld [vmem:[%s1 + $0x3a8] sm:$0xf]
    %v262 = vld [vmem:[%s1 + $0x3ac] sm:$0xf]
    %v263 = vld [vmem:[%s1 + $0x3b0] sm:$0xf]
    %v264 = vld [vmem:[%s1 + $0x3b4] sm:$0xf]
    %v265 = vld [vmem:[%s1 + $0x3b8] sm:$0xf]
    %v266 = vld [vmem:[%s1 + $0x3bc] sm:$0xf]
    %v267 = vld [vmem:[%s1 + $0x3c0] sm:$0xf]
    %v268 = vld [vmem:[%s1 + $0x3c4] sm:$0xf]
    %v269 = vld [vmem:[%s1 + $0x3c8] sm:$0xf]
    %v270 = vld [vmem:[%s1 + $0x3cc] sm:$0xf]
    %v271 = vld [vmem:[%s1 + $0x3d0] sm:$0xf]
    %v272 = vld [vmem:[%s1 + $0x3d4] sm:$0xf]
    %v273 = vld [vmem:[%s1 + $0x3d8] sm:$0xf]
    %v274 = vld [vmem:[%s1 + $0x3dc] sm:$0xf]
    %v275 = vld [vmem:[%s1 + $0x3e0] sm:$0xf]
    %v276 = vld [vmem:[%s1 + $0x3e4] sm:$0xf]
    %v277 = vld [vmem:[%s1 + $0x3e8] sm:$0xf]
    %v278 = vld [vmem:[%s1 + $0x3ec] sm:$0xf]
    %v279 = vld [vmem:[%s1 + $0x3f0] sm:$0xf]
    %v280 = vld [vmem:[%s1 + $0x3f4] sm:$0xf]
    %v281 = vld [vmem:[%s1 + $0x3f8] sm:$0xf]
    %v282 = vld [vmem:[%s1 + $0x3fc] sm:$0xf]
    %v283 = vld [vmem:[%s1 + $0x400] sm:$0xf]
    %v284 = vld [vmem:[%s1 + $0x404] sm:$0xf]
    %v285 = vld [vmem:[%s1 + $0x408] sm:$0xf]
    %v286 = vld [vmem:[%s1 + $0x40c] sm:$0xf]
    %v287 = vld [vmem:[%s1 + $0x410] sm:$0xf]
    %v288 = vld [vmem:[%s1 + $0x414] sm:$0xf]
    %v289 = vld [vmem:[%s1 + $0x418] sm:$0xf]
    %v290 = vld [vmem:[%s1 + $0x41c] sm:$0xf]
    %v291 = vld [vmem:[%s1 + $0x420] sm:$0xf]
    %v292 = vld [vmem:[%s1 + $0x424] sm:$0xf]
    %v293 = vld [vmem:[%s1 + $0x428] sm:$0xf]
    %v294 = vld [vmem:[%s1 + $0x42c] sm:$0xf]
    %v295 = vld [vmem:[%s1 + $0x430] sm:$0xf]
    %v296 = vld [vmem:[%s1 + $0x434] sm:$0xf]
    %v297 = vld [vmem:[%s1 + $0x438] sm:$0xf]
    %v298 = vld [vmem:[%s1 + $0x43c] sm:$0xf]
    %v299 = vld [vmem:[%s1 + $0x440] sm:$0xf]
    %v300 = vld [vmem:[%s1 + $0x444] sm:$0xf]
    %v301 = vld [vmem:[%s1 + $0x448] sm:$0xf]
    %v302 = vld [vmem:[%s1 + $0x44c] sm:$0xf]
    %v303 = vld [vmem:[%s1 + $0x450] sm:$0xf]
    %v304 = vld [vmem:[%s1 + $0x454] sm:$0xf]
    %v305 = vld [vmem:[%s1 + $0x458] sm:$0xf]
    %v306 = vld [vmem:[%s1 + $0x45c] sm:$0xf]
    %v307 = vld [vmem:[%s1 + $0x460] sm:$0xf]
    %v308 = vld [vmem:[%s1 + $0x464] sm:$0xf]
    %v309 = vld [vmem:[%s1 + $0x468] sm:$0xf]
    %v310 = vld [vmem:[%s1 + $0x46c] sm:$0xf]
    %v311 = vld [vmem:[%s1 + $0x470] sm:$0xf]
    %v312 = vld [vmem:[%s1 + $0x474] sm:$0xf]
    %v313 = vld [vmem:[%s1 + $0x478] sm:$0xf]
    %v314 = vld [vmem:[%s1 + $0x47c] sm:$0xf]
    %v315 = vld [vmem:[%s1 + $0x480] sm:$0xf]
    %v316 = vld [vmem:[%s1 + $0x484] sm:$0xf]
    %v317 = vld [vmem:[%s1 + $0x488] sm:$0xf]
    %v318 = vld [vmem:[%s1 + $0x48c] sm:$0xf]
    %v319 = vld [vmem:[%s1 + $0x490] sm:$0xf]
    %v320 = vld [vmem:[%s1 + $0x494] sm:$0xf]
    %v321 = vld [vmem:[%s1 + $0x498] sm:$0xf]
    %v322 = vld [vmem:[%s1 + $0x49c] sm:$0xf]
    %v323 = vld [vmem:[%s1 + $0x4a0] sm:$0xf]
    %v324 = vld [vmem:[%s1 + $0x4a4] sm:$0xf]
    %v325 = vld [vmem:[%s1 + $0x4a8] sm:$0xf]
    %v326 = vld [vmem:[%s1 + $0x4ac] sm:$0xf]
    %v327 = vld [vmem:[%s1 + $0x4b0] sm:$0xf]
    %v328 = vld [vmem:[%s1 + $0x4b4] sm:$0xf]
    %v329 = vld [vmem:[%s1 + $0x4b8] sm:$0xf]
    %v330 = vld [vmem:[%s1 + $0x4bc] sm:$0xf]
    %v331 = vld [vmem:[%s1 + $0x4c0] sm:$0xf]
    %v332 = vld [vmem:[%s1 + $0x4c4] sm:$0xf]
    %v333 = vld [vmem:[%s1 + $0x4c8] sm:$0xf]
    %v334 = vld [vmem:[%s1 + $0x4cc] sm:$0xf]
    %v335 = vld [vmem:[%s1 + $0x4d0] sm:$0xf]
    %v336 = vld [vmem:[%s1 + $0x4d4] sm:$0xf]
    %v337 = vld [vmem:[%s1 + $0x4d8] sm:$0xf]
    %v338 = vld [vmem:[%s1 + $0x4dc] sm:$0xf]
    %v339 = vld [vmem:[%s1 + $0x4e0] sm:$0xf]
    %v340 = vld [vmem:[%s1 + $0x4e4] sm:$0xf]
    %v341 = vld [vmem:[%s1 + $0x4e8] sm:$0xf]
    %v342 = vld [vmem:[%s1 + $0x4ec] sm:$0xf]
    %v343 = vld [vmem:[%s1 + $0x4f0] sm:$0xf]
    %v344 = vld [vmem:[%s1 + $0x4f4] sm:$0xf]
    %v345 = vld [vmem:[%s1 + $0x4f8] sm:$0xf]
    %v346 = vld [vmem:[%s1 + $0x4fc] sm:$0xf]
    %v347 = vld [vmem:[%s1 + $0x500] sm:$0xf]
    %v348 = vld [vmem:[%s1 + $0x504] sm:$0xf]
    %v349 = vld [vmem:[%s1 + $0x508] sm:$0xf]
    %v350 = vld [vmem:[%s1 + $0x50c] sm:$0xf]
    %v351 = vld [vmem:[%s1 + $0x510] sm:$0xf]
    %v352 = vld [vmem:[%s1 + $0x514] sm:$0xf]
    %v353 = vld [vmem:[%s1 + $0x518] sm:$0xf]
    %v354 = vld [vmem:[%s1 + $0x51c] sm:$0xf]
    %v355 = vld [vmem:[%s1 + $0x520] sm:$0xf]
    %v356 = vld [vmem:[%s1 + $0x524] sm:$0xf]
    %v357 = vld [vmem:[%s1 + $0x528] sm:$0xf]
    %v358 = vld [vmem:[%s1 + $0x52c] sm:$0xf]
    %v359 = vld [vmem:[%s1 + $0x530] sm:$0xf]
    %v360 = vld [vmem:[%s1 + $0x534] sm:$0xf]
    %v361 = vld [vmem:[%s1 + $0x538] sm:$0xf]
    %v362 = vld [vmem:[%s1 + $0x53c] sm:$0xf]
    %v363 = vld [vmem:[%s1 + $0x540] sm:$0xf]
    %v364 = vld [vmem:[%s1 + $0x544] sm:$0xf]
    %v365 = vld [vmem:[%s1 + $0x548] sm:$0xf]
    %v366 = vld [vmem:[%s1 + $0x54c] sm:$0xf]
    %v367 = vld [vmem:[%s1 + $0x550] sm:$0xf]
    %v368 = vld [vmem:[%s1 + $0x554] sm:$0xf]
    %v369 = vld [vmem:[%s1 + $0x558] sm:$0xf]
    %v370 = vld [vmem:[%s1 + $0x55c] sm:$0xf]
    %v371 = vld [vmem:[%s1 + $0x560] sm:$0xf]
    %v372 = vld [vmem:[%s1 + $0x564] sm:$0xf]
    %v373 = vld [vmem:[%s1 + $0x568] sm:$0xf]
    %v374 = vld [vmem:[%s1 + $0x56c] sm:$0xf]
    %v375 = vld [vmem:[%s1 + $0x570] sm:$0xf]
    %v376 = vld [vmem:[%s1 + $0x574] sm:$0xf]
    %v377 = vld [vmem:[%s1 + $0x578] sm:$0xf]
    %v378 = vld [vmem:[%s1 + $0x57c] sm:$0xf]
    %v379 = vld [vmem:[%s1 + $0x580] sm:$0xf]
    %v380 = vld [vmem:[%s1 + $0x584] sm:$0xf]
    %v381 = vld [vmem:[%s1 + $0x588] sm:$0xf]
    %v382 = vld [vmem:[%s1 + $0x58c] sm:$0xf]
    %v383 = vld [vmem:[%s1 + $0x590] sm:$0xf]
    %v384 = vld [vmem:[%s1 + $0x594] sm:$0xf]
    %v385 = vld [vmem:[%s1 + $0x598] sm:$0xf]
    %v386 = vld [vmem:[%s1 + $0x59c] sm:$0xf]
    %v387 = vld [vmem:[%s1 + $0x5a0] sm:$0xf]
    %v388 = vld [vmem:[%s1 + $0x5a4] sm:$0xf]
    %v389 = vld [vmem:[%s1 + $0x5a8] sm:$0xf]
    %v390 = vld [vmem:[%s1 + $0x5ac] sm:$0xf]
    %v391 = vld [vmem:[%s1 + $0x5b0] sm:$0xf]
    %v392 = vld [vmem:[%s1 + $0x5b4] sm:$0xf]
    %v393 = vld [vmem:[%s1 + $0x5b8] sm:$0xf]
    %v394 = vld [vmem:[%s1 + $0x5bc] sm:$0xf]
    %v395 = vld [vmem:[%s1 + $0x5c0] sm:$0xf]
    %v396 = vld [vmem:[%s1 + $0x5c4] sm:$0xf]
    %v397 = vld [vmem:[%s1 + $0x5c8] sm:$0xf]
    %v398 = vld [vmem:[%s1 + $0x5cc] sm:$0xf]
    %v399 = vld [vmem:[%s1 + $0x5d0] sm:$0xf]
    %v400 = vld [vmem:[%s1 + $0x5d4] sm:$0xf]
    %v401 = vld [vmem:[%s1 + $0x5d8] sm:$0xf]
    %v402 = vld [vmem:[%s1 + $0x5dc] sm:$0xf]
    %v403 = vld [vmem:[%s1 + $0x5e0] sm:$0xf]
    %v404 = vld [vmem:[%s1 + $0x5e4] sm:$0xf]
    %v405 = vld [vmem:[%s1 + $0x5e8] sm:$0xf]
    %v406 = vld [vmem:[%s1 + $0x5ec] sm:$0xf]
    %v407 = vld [vmem:[%s1 + $0x5f0] sm:$0xf]
    %v408 = vld [vmem:[%s1 + $0x5f4] sm:$0xf]
    %v409 = vld [vmem:[%s1 + $0x5f8] sm:$0xf]
    %v410 = vld [vmem:[%s1 + $0x5fc] sm:$0xf]
    %v411 = vld [vmem:[%s1 + $0x600] sm:$0xf]
    %v412 = vld [vmem:[%s1 + $0x604] sm:$0xf]
    %v413 = vld [vmem:[%s1 + $0x608] sm:$0xf]
    %v414 = vld [vmem:[%s1 + $0x60c] sm:$0xf]
    %v415 = vld [vmem:[%s1 + $0x610] sm:$0xf]
    %v416 = vld [vmem:[%s1 + $0x614] sm:$0xf]
    %v417 = vld [vmem:[%s1 + $0x618] sm:$0xf]
    %v418 = vld [vmem:[%s1 + $0x61c] sm:$0xf]
    %v419 = vld [vmem:[%s1 + $0x620] sm:$0xf]
    %v420 = vld [vmem:[%s1 + $0x624] sm:$0xf]
    %v421 = vld [vmem:[%s1 + $0x628] sm:$0xf]
    %v422 = vld [vmem:[%s1 + $0x62c] sm:$0xf]
    %v423 = vld [vmem:[%s1 + $0x630] sm:$0xf]
    %v424 = vld [vmem:[%s1 + $0x634] sm:$0xf]
    %v425 = vld [vmem:[%s1 + $0x638] sm:$0xf]
    %v426 = vld [vmem:[%s1 + $0x63c] sm:$0xf]
    %v427 = vld [vmem:[%s1 + $0x640] sm:$0xf]
    %v428 = vld [vmem:[%s1 + $0x644] sm:$0xf]
    %v429 = vld [vmem:[%s1 + $0x648] sm:$0xf]
    %v430 = vld [vmem:[%s1 + $0x64c] sm:$0xf]
    %v431 = vld [vmem:[%s1 + $0x650] sm:$0xf]
    %v432 = vld [vmem:[%s1 + $0x654] sm:$0xf]
    %v433 = vld [vmem:[%s1 + $0x658] sm:$0xf]
    %v434 = vld [vmem:[%s1 + $0x65c] sm:$0xf]
    %v435 = vld [vmem:[%s1 + $0x660] sm:$0xf]
    %v436 = vld [vmem:[%s1 + $0x664] sm:$0xf]
    %v437 = vld [vmem:[%s1 + $0x668] sm:$0xf]
    %v438 = vld [vmem:[%s1 + $0x66c] sm:$0xf]
    %v439 = vld [vmem:[%s1 + $0x670] sm:$0xf]
    %v440 = vld [vmem:[%s1 + $0x674] sm:$0xf]
    %v441 = vld [vmem:[%s1 + $0x678] sm:$0xf]
    %v442 = vld [vmem:[%s1 + $0x67c] sm:$0xf]
    %v443 = vld [vmem:[%s1 + $0x680] sm:$0xf]
    %v444 = vld [vmem:[%s1 + $0x684] sm:$0xf]
    %v445 = vld [vmem:[%s1 + $0x688] sm:$0xf]
    %v446 = vld [vmem:[%s1 + $0x68c] sm:$0xf]
    %v447 = vld [vmem:[%s1 + $0x690] sm:$0xf]
    %v448 = vld [vmem:[%s1 + $0x694] sm:$0xf]
    %v449 = vld [vmem:[%s1 + $0x698] sm:$0xf]
    %v450 = vld [vmem:[%s1 + $0x69c] sm:$0xf]
    %v451 = vld [vmem:[%s1 + $0x6a0] sm:$0xf]
    %v452 = vld [vmem:[%s1 + $0x6a4] sm:$0xf]
    %v453 = vld [vmem:[%s1 + $0x6a8] sm:$0xf]
    %v454 = vld [vmem:[%s1 + $0x6ac] sm:$0xf]
    %v455 = vld [vmem:[%s1 + $0x6b0] sm:$0xf]
    %v456 = vld [vmem:[%s1 + $0x6b4] sm:$0xf]
    %v457 = vld [vmem:[%s1 + $0x6b8] sm:$0xf]
    %v458 = vld [vmem:[%s1 + $0x6bc] sm:$0xf]
    %v459 = vld [vmem:[%s1 + $0x6c0] sm:$0xf]
    %v460 = vld [vmem:[%s1 + $0x6c4] sm:$0xf]
    %v461 = vld [vmem:[%s1 + $0x6c8] sm:$0xf]
    %v462 = vld [vmem:[%s1 + $0x6cc] sm:$0xf]
    %v463 = vld [vmem:[%s1 + $0x6d0] sm:$0xf]
    %v464 = vld [vmem:[%s1 + $0x6d4] sm:$0xf]
    %v465 = vld [vmem:[%s1 + $0x6d8] sm:$0xf]
    %v466 = vld [vmem:[%s1 + $0x6dc] sm:$0xf]
    %v467 = vld [vmem:[%s1 + $0x6e0] sm:$0xf]
    %v468 = vld [vmem:[%s1 + $0x6e4] sm:$0xf]
    %v469 = vld [vmem:[%s1 + $0x6e8] sm:$0xf]
    %v470 = vld [vmem:[%s1 + $0x6ec] sm:$0xf]
    %v471 = vld [vmem:[%s1 + $0x6f0] sm:$0xf]
    %v472 = vld [vmem:[%s1 + $0x6f4] sm:$0xf]
    %v473 = vld [vmem:[%s1 + $0x6f8] sm:$0xf]
    %v474 = vld [vmem:[%s1 + $0x6fc] sm:$0xf]
    %v475 = vld [vmem:[%s1 + $0x700] sm:$0xf]
    %v476 = vld [vmem:[%s1 + $0x704] sm:$0xf]
    %v477 = vld [vmem:[%s1 + $0x708] sm:$0xf]
    %v478 = vld [vmem:[%s1 + $0x70c] sm:$0xf]
    %v479 = vld [vmem:[%s1 + $0x710] sm:$0xf]
    %v480 = vld [vmem:[%s1 + $0x714] sm:$0xf]
    %v481 = vld [vmem:[%s1 + $0x718] sm:$0xf]
    %v482 = vld [vmem:[%s1 + $0x71c] sm:$0xf]
    %v483 = vld [vmem:[%s1 + $0x720] sm:$0xf]
    %v484 = vld [vmem:[%s1 + $0x724] sm:$0xf]
    %v485 = vld [vmem:[%s1 + $0x728] sm:$0xf]
    %v486 = vld [vmem:[%s1 + $0x72c] sm:$0xf]
    %v487 = vld [vmem:[%s1 + $0x730] sm:$0xf]
    %v488 = vld [vmem:[%s1 + $0x734] sm:$0xf]
    %v489 = vld [vmem:[%s1 + $0x738] sm:$0xf]
    %v490 = vld [vmem:[%s1 + $0x73c] sm:$0xf]
    %v491 = vld [vmem:[%s1 + $0x740] sm:$0xf]
    %v492 = vld [vmem:[%s1 + $0x744] sm:$0xf]
    %v493 = vld [vmem:[%s1 + $0x748] sm:$0xf]
    %v494 = vld [vmem:[%s1 + $0x74c] sm:$0xf]
    %v495 = vld [vmem:[%s1 + $0x750] sm:$0xf]
    %v496 = vld [vmem:[%s1 + $0x754] sm:$0xf]
    %v497 = vld [vmem:[%s1 + $0x758] sm:$0xf]
    %v498 = vld [vmem:[%s1 + $0x75c] sm:$0xf]
    %v499 = vld [vmem:[%s1 + $0x760] sm:$0xf]
    %v500 = vld [vmem:[%s1 + $0x764] sm:$0xf]
    %v501 = vld [vmem:[%s1 + $0x768] sm:$0xf]
    %v502 = vld [vmem:[%s1 + $0x76c] sm:$0xf]
    %v503 = vld [vmem:[%s1 + $0x770] sm:$0xf]
    %v504 = vld [vmem:[%s1 + $0x774] sm:$0xf]
    %v505 = vld [vmem:[%s1 + $0x778] sm:$0xf]
    %v506 = vld [vmem:[%s1 + $0x77c] sm:$0xf]
    %v507 = vld [vmem:[%s1 + $0x780] sm:$0xf]
    %v508 = vld [vmem:[%s1 + $0x784] sm:$0xf]
    %v509 = vld [vmem:[%s1 + $0x788] sm:$0xf]
    %v510 = vld [vmem:[%s1 + $0x78c] sm:$0xf]
    %v511 = vld [vmem:[%s1 + $0x790] sm:$0xf]
    %v512 = vld [vmem:[%s1 + $0x794] sm:$0xf]
    %v513 = vld [vmem:[%s1 + $0x798] sm:$0xf]
    %v514 = vld [vmem:[%s1 + $0x79c] sm:$0xf]
    %v515 = vld [vmem:[%s1 + $0x7a0] sm:$0xf]
    %v516 = vld [vmem:[%s1 + $0x7a4] sm:$0xf]
    %v517 = vld [vmem:[%s1 + $0x7a8] sm:$0xf]
    %v518 = vld [vmem:[%s1 + $0x7ac] sm:$0xf]
    %v519 = vld [vmem:[%s1 + $0x7b0] sm:$0xf]
    %v520 = vld [vmem:[%s1 + $0x7b4] sm:$0xf]
    %v521 = vld [vmem:[%s1 + $0x7b8] sm:$0xf]
    %v522 = vld [vmem:[%s1 + $0x7bc] sm:$0xf]
    %v523 = vld [vmem:[%s1 + $0x7c0] sm:$0xf]
    %v524 = vld [vmem:[%s1 + $0x7c4] sm:$0xf]
    %v525 = vld [vmem:[%s1 + $0x7c8] sm:$0xf]
    %v526 = vld [vmem:[%s1 + $0x7cc] sm:$0xf]
    %v527 = vld [vmem:[%s1 + $0x7d0] sm:$0xf]
    %v528 = vld [vmem:[%s1 + $0x7d4] sm:$0xf]
    %v529 = vld [vmem:[%s1 + $0x7d8] sm:$0xf]
    %v530 = vld [vmem:[%s1 + $0x7dc] sm:$0xf]
    %v531 = vld [vmem:[%s1 + $0x7e0] sm:$0xf]
    %v532 = vld [vmem:[%s1 + $0x7e4] sm:$0xf]
    %v533 = vld [vmem:[%s1 + $0x7e8] sm:$0xf]
    %v534 = vld [vmem:[%s1 + $0x7ec] sm:$0xf]
    %v535 = vld [vmem:[%s1 + $0x7f0] sm:$0xf]
    %v536 = vld [vmem:[%s1 + $0x7f4] sm:$0xf]
    %v537 = vld [vmem:[%s1 + $0x7f8] sm:$0xf]
    %v538 = vld [vmem:[%s1 + $0x7fc] sm:$0xf]
    %v543 = vcombine.high %v23, %v23
    %v545 = vunpack.c.l.s4 1966171168
    %v546 = vunpack.c.0.s8 %v545
    %v547 = vlaneseq
    %v548 = vshrl.u32 %v547, 7
    %v549 = vsub.s32 %v546, %v548
    %v550 = vrot.slane %v23, %v549
    %v552 = vunpack.c.l.s4 1966171168
    %v553 = vunpack.c.0.s8 %v552
    %v554 = vlaneseq
    %v555 = vshrl.u32 %v554, 7
    %v556 = vsub.s32 %v553, %v555
    %v557 = vrot.slane %v543, %v556
    %v558 = vcombine.high %v550, %v550
    %v559 = vcombine.high %v557, %v557
    %v561 = vunpack.c.l.s4 1966171168
    %v562 = vunpack.c.0.s8 %v561
    %v563 = vlaneseq
    %v564 = vshrl.u32 %v563, 7
    %v565 = vsub.s32 %v562, %v564
    %v566 = vrot.slane %v550, %v565
    %v568 = vunpack.c.l.s4 1966171168
    %v569 = vunpack.c.0.s8 %v568
    %v570 = vlaneseq
    %v571 = vshrl.u32 %v570, 7
    %v572 = vsub.s32 %v569, %v571
    %v573 = vrot.slane %v557, %v572
    %v575 = vunpack.c.l.s4 1966171168
    %v576 = vunpack.c.0.s8 %v575
    %v577 = vlaneseq
    %v578 = vshrl.u32 %v577, 7
    %v579 = vsub.s32 %v576, %v578
    %v580 = vrot.slane %v558, %v579
    %v582 = vunpack.c.l.s4 1966171168
    %v583 = vunpack.c.0.s8 %v582
    %v584 = vlaneseq
    %v585 = vshrl.u32 %v584, 7
    %v586 = vsub.s32 %v583, %v585
    %v587 = vrot.slane %v559, %v586
    %v588 = vcombine.high %v566, %v566
    %v589 = vcombine.high %v573, %v573
    %v590 = vcombine.high %v580, %v580
    %v591 = vcombine.high %v587, %v587
    %v592 = vcombine.high %v24, %v24
    %v594 = vunpack.c.l.s4 1966171168
    %v595 = vunpack.c.0.s8 %v594
    %v596 = vlaneseq
    %v597 = vshrl.u32 %v596, 7
    %v598 = vsub.s32 %v595, %v597
    %v599 = vrot.slane %v24, %v598
    %v601 = vunpack.c.l.s4 1966171168
    %v602 = vunpack.c.0.s8 %v601
    %v603 = vlaneseq
    %v604 = vshrl.u32 %v603, 7
    %v605 = vsub.s32 %v602, %v604
    %v606 = vrot.slane %v592, %v605
    %v607 = vcombine.high %v599, %v599
    %v608 = vcombine.high %v606, %v606
    %v610 = vunpack.c.l.s4 1966171168
    %v611 = vunpack.c.0.s8 %v610
    %v612 = vlaneseq
    %v613 = vshrl.u32 %v612, 7
    %v614 = vsub.s32 %v611, %v613
    %v615 = vrot.slane %v599, %v614
    %v617 = vunpack.c.l.s4 1966171168
    %v618 = vunpack.c.0.s8 %v617
    %v619 = vlaneseq
    %v620 = vshrl.u32 %v619, 7
    %v621 = vsub.s32 %v618, %v620
    %v622 = vrot.slane %v606, %v621
    %v624 = vunpack.c.l.s4 1966171168
    %v625 = vunpack.c.0.s8 %v624
    %v626 = vlaneseq
    %v627 = vshrl.u32 %v626, 7
    %v628 = vsub.s32 %v625, %v627
    %v629 = vrot.slane %v607, %v628
    %v631 = vunpack.c.l.s4 1966171168
    %v632 = vunpack.c.0.s8 %v631
    %v633 = vlaneseq
    %v634 = vshrl.u32 %v633, 7
    %v635 = vsub.s32 %v632, %v634
    %v636 = vrot.slane %v608, %v635
    %v637 = vcombine.high %v615, %v615
    %v638 = vcombine.high %v622, %v622
    %v639 = vcombine.high %v629, %v629
    %v640 = vcombine.high %v636, %v636
    %v641 = vcombine.high %v25, %v25
    %v643 = vunpack.c.l.s4 1966171168
    %v644 = vunpack.c.0.s8 %v643
    %v645 = vlaneseq
    %v646 = vshrl.u32 %v645, 7
    %v647 = vsub.s32 %v644, %v646
    %v648 = vrot.slane %v25, %v647
    %v650 = vunpack.c.l.s4 1966171168
    %v651 = vunpack.c.0.s8 %v650
    %v652 = vlaneseq
    %v653 = vshrl.u32 %v652, 7
    %v654 = vsub.s32 %v651, %v653
    %v655 = vrot.slane %v641, %v654
    %v656 = vcombine.high %v648, %v648
    %v657 = vcombine.high %v655, %v655
    %v659 = vunpack.c.l.s4 1966171168
    %v660 = vunpack.c.0.s8 %v659
    %v661 = vlaneseq
    %v662 = vshrl.u32 %v661, 7
    %v663 = vsub.s32 %v660, %v662
    %v664 = vrot.slane %v648, %v663
    %v666 = vunpack.c.l.s4 1966171168
    %v667 = vunpack.c.0.s8 %v666
    %v668 = vlaneseq
    %v669 = vshrl.u32 %v668, 7
    %v670 = vsub.s32 %v667, %v669
    %v671 = vrot.slane %v655, %v670
    %v673 = vunpack.c.l.s4 1966171168
    %v674 = vunpack.c.0.s8 %v673
    %v675 = vlaneseq
    %v676 = vshrl.u32 %v675, 7
    %v677 = vsub.s32 %v674, %v676
    %v678 = vrot.slane %v656, %v677
    %v680 = vunpack.c.l.s4 1966171168
    %v681 = vunpack.c.0.s8 %v680
    %v682 = vlaneseq
    %v683 = vshrl.u32 %v682, 7
    %v684 = vsub.s32 %v681, %v683
    %v685 = vrot.slane %v657, %v684
    %v686 = vcombine.high %v664, %v664
    %v687 = vcombine.high %v671, %v671
    %v688 = vcombine.high %v678, %v678
    %v689 = vcombine.high %v685, %v685
    %v690 = vcombine.high %v26, %v26
    %v692 = vunpack.c.l.s4 1966171168
    %v693 = vunpack.c.0.s8 %v692
    %v694 = vlaneseq
    %v695 = vshrl.u32 %v694, 7
    %v696 = vsub.s32 %v693, %v695
    %v697 = vrot.slane %v26, %v696
    %v699 = vunpack.c.l.s4 1966171168
    %v700 = vunpack.c.0.s8 %v699
    %v701 = vlaneseq
    %v702 = vshrl.u32 %v701, 7
    %v703 = vsub.s32 %v700, %v702
    %v704 = vrot.slane %v690, %v703
    %v705 = vcombine.high %v697, %v697
    %v706 = vcombine.high %v704, %v704
    %v708 = vunpack.c.l.s4 1966171168
    %v709 = vunpack.c.0.s8 %v708
    %v710 = vlaneseq
    %v711 = vshrl.u32 %v710, 7
    %v712 = vsub.s32 %v709, %v711
    %v713 = vrot.slane %v697, %v712
    %v715 = vunpack.c.l.s4 1966171168
    %v716 = vunpack.c.0.s8 %v715
    %v717 = vlaneseq
    %v718 = vshrl.u32 %v717, 7
    %v719 = vsub.s32 %v716, %v718
    %v720 = vrot.slane %v704, %v719
    %v722 = vunpack.c.l.s4 1966171168
    %v723 = vunpack.c.0.s8 %v722
    %v724 = vlaneseq
    %v725 = vshrl.u32 %v724, 7
    %v726 = vsub.s32 %v723, %v725
    %v727 = vrot.slane %v705, %v726
    %v729 = vunpack.c.l.s4 1966171168
    %v730 = vunpack.c.0.s8 %v729
    %v731 = vlaneseq
    %v732 = vshrl.u32 %v731, 7
    %v733 = vsub.s32 %v730, %v732
    %v734 = vrot.slane %v706, %v733
    %v735 = vcombine.high %v713, %v713
    %v736 = vcombine.high %v720, %v720
    %v737 = vcombine.high %v727, %v727
    %v738 = vcombine.high %v734, %v734
    %v1283 = vunpack.c.l.b16 %v27
    %v1284 = vunpack.c.l.b16 %v28
    %v1285 = vunpack.c.l.b16 %v29
    %v1286 = vunpack.c.l.b16 %v30
    %v1287 = vunpack.c.l.b16 %v31
    %v1288 = vunpack.c.l.b16 %v32
    %v1289 = vunpack.c.l.b16 %v33
    %v1290 = vunpack.c.l.b16 %v34
    %v1291 = vunpack.c.l.b16 %v35
    %v1292 = vunpack.c.l.b16 %v36
    %v1293 = vunpack.c.l.b16 %v37
    %v1294 = vunpack.c.l.b16 %v38
    %v1295 = vunpack.c.l.b16 %v39
    %v1296 = vunpack.c.l.b16 %v40
    %v1297 = vunpack.c.l.b16 %v41
    %v1298 = vunpack.c.l.b16 %v42
    %v1299 = vunpack.c.l.b16 %v43
    %v1300 = vunpack.c.l.b16 %v44
    %v1301 = vunpack.c.l.b16 %v45
    %v1302 = vunpack.c.l.b16 %v46
    %v1303 = vunpack.c.l.b16 %v47
    %v1304 = vunpack.c.l.b16 %v48
    %v1305 = vunpack.c.l.b16 %v49
    %v1306 = vunpack.c.l.b16 %v50
    %v1307 = vunpack.c.l.b16 %v51
    %v1308 = vunpack.c.l.b16 %v52
    %v1309 = vunpack.c.l.b16 %v53
    %v1310 = vunpack.c.l.b16 %v54
    %v1311 = vunpack.c.l.b16 %v55
    %v1312 = vunpack.c.l.b16 %v56
    %v1313 = vunpack.c.l.b16 %v57
    %v1314 = vunpack.c.l.b16 %v58
    %v1315 = vunpack.c.l.b16 %v59
    %v1316 = vunpack.c.l.b16 %v60
    %v1317 = vunpack.c.l.b16 %v61
    %v1318 = vunpack.c.l.b16 %v62
    %v1319 = vunpack.c.l.b16 %v63
    %v1320 = vunpack.c.l.b16 %v64
    %v1321 = vunpack.c.l.b16 %v65
    %v1322 = vunpack.c.l.b16 %v66
    %v1323 = vunpack.c.l.b16 %v67
    %v1324 = vunpack.c.l.b16 %v68
    %v1325 = vunpack.c.l.b16 %v69
    %v1326 = vunpack.c.l.b16 %v70
    %v1327 = vunpack.c.l.b16 %v71
    %v1328 = vunpack.c.l.b16 %v72
    %v1329 = vunpack.c.l.b16 %v73
    %v1330 = vunpack.c.l.b16 %v74
    %v1331 = vunpack.c.l.b16 %v75
    %v1332 = vunpack.c.l.b16 %v76
    %v1333 = vunpack.c.l.b16 %v77
    %v1334 = vunpack.c.l.b16 %v78
    %v1335 = vunpack.c.l.b16 %v79
    %v1336 = vunpack.c.l.b16 %v80
    %v1337 = vunpack.c.l.b16 %v81
    %v1338 = vunpack.c.l.b16 %v82
    %v1339 = vunpack.c.l.b16 %v83
    %v1340 = vunpack.c.l.b16 %v84
    %v1341 = vunpack.c.l.b16 %v85
    %v1342 = vunpack.c.l.b16 %v86
    %v1343 = vunpack.c.l.b16 %v87
    %v1344 = vunpack.c.l.b16 %v88
    %v1345 = vunpack.c.l.b16 %v89
    %v1346 = vunpack.c.l.b16 %v90
    %v1347 = vunpack.c.l.b16 %v91
    %v1348 = vunpack.c.l.b16 %v92
    %v1349 = vunpack.c.l.b16 %v93
    %v1350 = vunpack.c.l.b16 %v94
    %v1351 = vunpack.c.l.b16 %v95
    %v1352 = vunpack.c.l.b16 %v96
    %v1353 = vunpack.c.l.b16 %v97
    %v1354 = vunpack.c.l.b16 %v98
    %v1355 = vunpack.c.l.b16 %v99
    %v1356 = vunpack.c.l.b16 %v100
    %v1357 = vunpack.c.l.b16 %v101
    %v1358 = vunpack.c.l.b16 %v102
    %v1359 = vunpack.c.l.b16 %v103
    %v1360 = vunpack.c.l.b16 %v104
    %v1361 = vunpack.c.l.b16 %v105
    %v1362 = vunpack.c.l.b16 %v106
    %v1363 = vunpack.c.l.b16 %v107
    %v1364 = vunpack.c.l.b16 %v108
    %v1365 = vunpack.c.l.b16 %v109
    %v1366 = vunpack.c.l.b16 %v110
    %v1367 = vunpack.c.l.b16 %v111
    %v1368 = vunpack.c.l.b16 %v112
    %v1369 = vunpack.c.l.b16 %v113
    %v1370 = vunpack.c.l.b16 %v114
    %v1371 = vunpack.c.l.b16 %v115
    %v1372 = vunpack.c.l.b16 %v116
    %v1373 = vunpack.c.l.b16 %v117
    %v1374 = vunpack.c.l.b16 %v118
    %v1375 = vunpack.c.l.b16 %v119
    %v1376 = vunpack.c.l.b16 %v120
    %v1377 = vunpack.c.l.b16 %v121
    %v1378 = vunpack.c.l.b16 %v122
    %v1379 = vunpack.c.l.b16 %v123
    %v1380 = vunpack.c.l.b16 %v124
    %v1381 = vunpack.c.l.b16 %v125
    %v1382 = vunpack.c.l.b16 %v126
    %v1383 = vunpack.c.l.b16 %v127
    %v1384 = vunpack.c.l.b16 %v128
    %v1385 = vunpack.c.l.b16 %v129
    %v1386 = vunpack.c.l.b16 %v130
    %v1387 = vunpack.c.l.b16 %v131
    %v1388 = vunpack.c.l.b16 %v132
    %v1389 = vunpack.c.l.b16 %v133
    %v1390 = vunpack.c.l.b16 %v134
    %v1391 = vunpack.c.l.b16 %v135
    %v1392 = vunpack.c.l.b16 %v136
    %v1393 = vunpack.c.l.b16 %v137
    %v1394 = vunpack.c.l.b16 %v138
    %v1395 = vunpack.c.l.b16 %v139
    %v1396 = vunpack.c.l.b16 %v140
    %v1397 = vunpack.c.l.b16 %v141
    %v1398 = vunpack.c.l.b16 %v142
    %v1399 = vunpack.c.l.b16 %v143
    %v1400 = vunpack.c.l.b16 %v144
    %v1401 = vunpack.c.l.b16 %v145
    %v1402 = vunpack.c.l.b16 %v146
    %v1403 = vunpack.c.l.b16 %v147
    %v1404 = vunpack.c.l.b16 %v148
    %v1405 = vunpack.c.l.b16 %v149
    %v1406 = vunpack.c.l.b16 %v150
    %v1407 = vunpack.c.l.b16 %v151
    %v1408 = vunpack.c.l.b16 %v152
    %v1409 = vunpack.c.l.b16 %v153
    %v1410 = vunpack.c.l.b16 %v154
    %v1411 = vunpack.c.l.b16 %v155
    %v1412 = vunpack.c.l.b16 %v156
    %v1413 = vunpack.c.l.b16 %v157
    %v1414 = vunpack.c.l.b16 %v158
    %v1415 = vunpack.c.l.b16 %v159
    %v1416 = vunpack.c.l.b16 %v160
    %v1417 = vunpack.c.l.b16 %v161
    %v1418 = vunpack.c.l.b16 %v162
    %v1419 = vunpack.c.l.b16 %v163
    %v1420 = vunpack.c.l.b16 %v164
    %v1421 = vunpack.c.l.b16 %v165
    %v1422 = vunpack.c.l.b16 %v166
    %v1423 = vunpack.c.l.b16 %v167
    %v1424 = vunpack.c.l.b16 %v168
    %v1425 = vunpack.c.l.b16 %v169
    %v1426 = vunpack.c.l.b16 %v170
    %v1427 = vunpack.c.l.b16 %v171
    %v1428 = vunpack.c.l.b16 %v172
    %v1429 = vunpack.c.l.b16 %v173
    %v1430 = vunpack.c.l.b16 %v174
    %v1431 = vunpack.c.l.b16 %v175
    %v1432 = vunpack.c.l.b16 %v176
    %v1433 = vunpack.c.l.b16 %v177
    %v1434 = vunpack.c.l.b16 %v178
    %v1435 = vunpack.c.l.b16 %v179
    %v1436 = vunpack.c.l.b16 %v180
    %v1437 = vunpack.c.l.b16 %v181
    %v1438 = vunpack.c.l.b16 %v182
    %v1439 = vunpack.c.l.b16 %v183
    %v1440 = vunpack.c.l.b16 %v184
    %v1441 = vunpack.c.l.b16 %v185
    %v1442 = vunpack.c.l.b16 %v186
    %v1443 = vunpack.c.l.b16 %v187
    %v1444 = vunpack.c.l.b16 %v188
    %v1445 = vunpack.c.l.b16 %v189
    %v1446 = vunpack.c.l.b16 %v190
    %v1447 = vunpack.c.l.b16 %v191
    %v1448 = vunpack.c.l.b16 %v192
    %v1449 = vunpack.c.l.b16 %v193
    %v1450 = vunpack.c.l.b16 %v194
    %v1451 = vunpack.c.l.b16 %v195
    %v1452 = vunpack.c.l.b16 %v196
    %v1453 = vunpack.c.l.b16 %v197
    %v1454 = vunpack.c.l.b16 %v198
    %v1455 = vunpack.c.l.b16 %v199
    %v1456 = vunpack.c.l.b16 %v200
    %v1457 = vunpack.c.l.b16 %v201
    %v1458 = vunpack.c.l.b16 %v202
    %v1459 = vunpack.c.l.b16 %v203
    %v1460 = vunpack.c.l.b16 %v204
    %v1461 = vunpack.c.l.b16 %v205
    %v1462 = vunpack.c.l.b16 %v206
    %v1463 = vunpack.c.l.b16 %v207
    %v1464 = vunpack.c.l.b16 %v208
    %v1465 = vunpack.c.l.b16 %v209
    %v1466 = vunpack.c.l.b16 %v210
    %v1467 = vunpack.c.l.b16 %v211
    %v1468 = vunpack.c.l.b16 %v212
    %v1469 = vunpack.c.l.b16 %v213
    %v1470 = vunpack.c.l.b16 %v214
    %v1471 = vunpack.c.l.b16 %v215
    %v1472 = vunpack.c.l.b16 %v216
    %v1473 = vunpack.c.l.b16 %v217
    %v1474 = vunpack.c.l.b16 %v218
    %v1475 = vunpack.c.l.b16 %v219
    %v1476 = vunpack.c.l.b16 %v220
    %v1477 = vunpack.c.l.b16 %v221
    %v1478 = vunpack.c.l.b16 %v222
    %v1479 = vunpack.c.l.b16 %v223
    %v1480 = vunpack.c.l.b16 %v224
    %v1481 = vunpack.c.l.b16 %v225
    %v1482 = vunpack.c.l.b16 %v226
    %v1483 = vunpack.c.l.b16 %v227
    %v1484 = vunpack.c.l.b16 %v228
    %v1485 = vunpack.c.l.b16 %v229
    %v1486 = vunpack.c.l.b16 %v230
    %v1487 = vunpack.c.l.b16 %v231
    %v1488 = vunpack.c.l.b16 %v232
    %v1489 = vunpack.c.l.b16 %v233
    %v1490 = vunpack.c.l.b16 %v234
    %v1491 = vunpack.c.l.b16 %v235
    %v1492 = vunpack.c.l.b16 %v236
    %v1493 = vunpack.c.l.b16 %v237
    %v1494 = vunpack.c.l.b16 %v238
    %v1495 = vunpack.c.l.b16 %v239
    %v1496 = vunpack.c.l.b16 %v240
    %v1497 = vunpack.c.l.b16 %v241
    %v1498 = vunpack.c.l.b16 %v242
    %v1499 = vunpack.c.l.b16 %v243
    %v1500 = vunpack.c.l.b16 %v244
    %v1501 = vunpack.c.l.b16 %v245
    %v1502 = vunpack.c.l.b16 %v246
    %v1503 = vunpack.c.l.b16 %v247
    %v1504 = vunpack.c.l.b16 %v248
    %v1505 = vunpack.c.l.b16 %v249
    %v1506 = vunpack.c.l.b16 %v250
    %v1507 = vunpack.c.l.b16 %v251
    %v1508 = vunpack.c.l.b16 %v252
    %v1509 = vunpack.c.l.b16 %v253
    %v1510 = vunpack.c.l.b16 %v254
    %v1511 = vunpack.c.l.b16 %v255
    %v1512 = vunpack.c.l.b16 %v256
    %v1513 = vunpack.c.l.b16 %v257
    %v1514 = vunpack.c.l.b16 %v258
    %v1515 = vunpack.c.l.b16 %v259
    %v1516 = vunpack.c.l.b16 %v260
    %v1517 = vunpack.c.l.b16 %v261
    %v1518 = vunpack.c.l.b16 %v262
    %v1519 = vunpack.c.l.b16 %v263
    %v1520 = vunpack.c.l.b16 %v264
    %v1521 = vunpack.c.l.b16 %v265
    %v1522 = vunpack.c.l.b16 %v266
    %v1523 = vunpack.c.l.b16 %v267
    %v1524 = vunpack.c.l.b16 %v268
    %v1525 = vunpack.c.l.b16 %v269
    %v1526 = vunpack.c.l.b16 %v270
    %v1527 = vunpack.c.l.b16 %v271
    %v1528 = vunpack.c.l.b16 %v272
    %v1529 = vunpack.c.l.b16 %v273
    %v1530 = vunpack.c.l.b16 %v274
    %v1531 = vunpack.c.l.b16 %v275
    %v1532 = vunpack.c.l.b16 %v276
    %v1533 = vunpack.c.l.b16 %v277
    %v1534 = vunpack.c.l.b16 %v278
    %v1535 = vunpack.c.l.b16 %v279
    %v1536 = vunpack.c.l.b16 %v280
    %v1537 = vunpack.c.l.b16 %v281
    %v1538 = vunpack.c.l.b16 %v282
    %v1539 = vunpack.c.l.b16 %v283
    %v1540 = vunpack.c.l.b16 %v284
    %v1541 = vunpack.c.l.b16 %v285
    %v1542 = vunpack.c.l.b16 %v286
    %v1543 = vunpack.c.l.b16 %v287
    %v1544 = vunpack.c.l.b16 %v288
    %v1545 = vunpack.c.l.b16 %v289
    %v1546 = vunpack.c.l.b16 %v290
    %v1547 = vunpack.c.l.b16 %v291
    %v1548 = vunpack.c.l.b16 %v292
    %v1549 = vunpack.c.l.b16 %v293
    %v1550 = vunpack.c.l.b16 %v294
    %v1551 = vunpack.c.l.b16 %v295
    %v1552 = vunpack.c.l.b16 %v296
    %v1553 = vunpack.c.l.b16 %v297
    %v1554 = vunpack.c.l.b16 %v298
    %v1555 = vunpack.c.l.b16 %v299
    %v1556 = vunpack.c.l.b16 %v300
    %v1557 = vunpack.c.l.b16 %v301
    %v1558 = vunpack.c.l.b16 %v302
    %v1559 = vunpack.c.l.b16 %v303
    %v1560 = vunpack.c.l.b16 %v304
    %v1561 = vunpack.c.l.b16 %v305
    %v1562 = vunpack.c.l.b16 %v306
    %v1563 = vunpack.c.l.b16 %v307
    %v1564 = vunpack.c.l.b16 %v308
    %v1565 = vunpack.c.l.b16 %v309
    %v1566 = vunpack.c.l.b16 %v310
    %v1567 = vunpack.c.l.b16 %v311
    %v1568 = vunpack.c.l.b16 %v312
    %v1569 = vunpack.c.l.b16 %v313
    %v1570 = vunpack.c.l.b16 %v314
    %v1571 = vunpack.c.l.b16 %v315
    %v1572 = vunpack.c.l.b16 %v316
    %v1573 = vunpack.c.l.b16 %v317
    %v1574 = vunpack.c.l.b16 %v318
    %v1575 = vunpack.c.l.b16 %v319
    %v1576 = vunpack.c.l.b16 %v320
    %v1577 = vunpack.c.l.b16 %v321
    %v1578 = vunpack.c.l.b16 %v322
    %v1579 = vunpack.c.l.b16 %v323
    %v1580 = vunpack.c.l.b16 %v324
    %v1581 = vunpack.c.l.b16 %v325
    %v1582 = vunpack.c.l.b16 %v326
    %v1583 = vunpack.c.l.b16 %v327
    %v1584 = vunpack.c.l.b16 %v328
    %v1585 = vunpack.c.l.b16 %v329
    %v1586 = vunpack.c.l.b16 %v330
    %v1587 = vunpack.c.l.b16 %v331
    %v1588 = vunpack.c.l.b16 %v332
    %v1589 = vunpack.c.l.b16 %v333
    %v1590 = vunpack.c.l.b16 %v334
    %v1591 = vunpack.c.l.b16 %v335
    %v1592 = vunpack.c.l.b16 %v336
    %v1593 = vunpack.c.l.b16 %v337
    %v1594 = vunpack.c.l.b16 %v338
    %v1595 = vunpack.c.l.b16 %v339
    %v1596 = vunpack.c.l.b16 %v340
    %v1597 = vunpack.c.l.b16 %v341
    %v1598 = vunpack.c.l.b16 %v342
    %v1599 = vunpack.c.l.b16 %v343
    %v1600 = vunpack.c.l.b16 %v344
    %v1601 = vunpack.c.l.b16 %v345
    %v1602 = vunpack.c.l.b16 %v346
    %v1603 = vunpack.c.l.b16 %v347
    %v1604 = vunpack.c.l.b16 %v348
    %v1605 = vunpack.c.l.b16 %v349
    %v1606 = vunpack.c.l.b16 %v350
    %v1607 = vunpack.c.l.b16 %v351
    %v1608 = vunpack.c.l.b16 %v352
    %v1609 = vunpack.c.l.b16 %v353
    %v1610 = vunpack.c.l.b16 %v354
    %v1611 = vunpack.c.l.b16 %v355
    %v1612 = vunpack.c.l.b16 %v356
    %v1613 = vunpack.c.l.b16 %v357
    %v1614 = vunpack.c.l.b16 %v358
    %v1615 = vunpack.c.l.b16 %v359
    %v1616 = vunpack.c.l.b16 %v360
    %v1617 = vunpack.c.l.b16 %v361
    %v1618 = vunpack.c.l.b16 %v362
    %v1619 = vunpack.c.l.b16 %v363
    %v1620 = vunpack.c.l.b16 %v364
    %v1621 = vunpack.c.l.b16 %v365
    %v1622 = vunpack.c.l.b16 %v366
    %v1623 = vunpack.c.l.b16 %v367
    %v1624 = vunpack.c.l.b16 %v368
    %v1625 = vunpack.c.l.b16 %v369
    %v1626 = vunpack.c.l.b16 %v370
    %v1627 = vunpack.c.l.b16 %v371
    %v1628 = vunpack.c.l.b16 %v372
    %v1629 = vunpack.c.l.b16 %v373
    %v1630 = vunpack.c.l.b16 %v374
    %v1631 = vunpack.c.l.b16 %v375
    %v1632 = vunpack.c.l.b16 %v376
    %v1633 = vunpack.c.l.b16 %v377
    %v1634 = vunpack.c.l.b16 %v378
    %v1635 = vunpack.c.l.b16 %v379
    %v1636 = vunpack.c.l.b16 %v380
    %v1637 = vunpack.c.l.b16 %v381
    %v1638 = vunpack.c.l.b16 %v382
    %v1639 = vunpack.c.l.b16 %v383
    %v1640 = vunpack.c.l.b16 %v384
    %v1641 = vunpack.c.l.b16 %v385
    %v1642 = vunpack.c.l.b16 %v386
    %v1643 = vunpack.c.l.b16 %v387
    %v1644 = vunpack.c.l.b16 %v388
    %v1645 = vunpack.c.l.b16 %v389
    %v1646 = vunpack.c.l.b16 %v390
    %v1647 = vunpack.c.l.b16 %v391
    %v1648 = vunpack.c.l.b16 %v392
    %v1649 = vunpack.c.l.b16 %v393
    %v1650 = vunpack.c.l.b16 %v394
    %v1651 = vunpack.c.l.b16 %v395
    %v1652 = vunpack.c.l.b16 %v396
    %v1653 = vunpack.c.l.b16 %v397
    %v1654 = vunpack.c.l.b16 %v398
    %v1655 = vunpack.c.l.b16 %v399
    %v1656 = vunpack.c.l.b16 %v400
    %v1657 = vunpack.c.l.b16 %v401
    %v1658 = vunpack.c.l.b16 %v402
    %v1659 = vunpack.c.l.b16 %v403
    %v1660 = vunpack.c.l.b16 %v404
    %v1661 = vunpack.c.l.b16 %v405
    %v1662 = vunpack.c.l.b16 %v406
    %v1663 = vunpack.c.l.b16 %v407
    %v1664 = vunpack.c.l.b16 %v408
    %v1665 = vunpack.c.l.b16 %v409
    %v1666 = vunpack.c.l.b16 %v410
    %v1667 = vunpack.c.l.b16 %v411
    %v1668 = vunpack.c.l.b16 %v412
    %v1669 = vunpack.c.l.b16 %v413
    %v1670 = vunpack.c.l.b16 %v414
    %v1671 = vunpack.c.l.b16 %v415
    %v1672 = vunpack.c.l.b16 %v416
    %v1673 = vunpack.c.l.b16 %v417
    %v1674 = vunpack.c.l.b16 %v418
    %v1675 = vunpack.c.l.b16 %v419
    %v1676 = vunpack.c.l.b16 %v420
    %v1677 = vunpack.c.l.b16 %v421
    %v1678 = vunpack.c.l.b16 %v422
    %v1679 = vunpack.c.l.b16 %v423
    %v1680 = vunpack.c.l.b16 %v424
    %v1681 = vunpack.c.l.b16 %v425
    %v1682 = vunpack.c.l.b16 %v426
    %v1683 = vunpack.c.l.b16 %v427
    %v1684 = vunpack.c.l.b16 %v428
    %v1685 = vunpack.c.l.b16 %v429
    %v1686 = vunpack.c.l.b16 %v430
    %v1687 = vunpack.c.l.b16 %v431
    %v1688 = vunpack.c.l.b16 %v432
    %v1689 = vunpack.c.l.b16 %v433
    %v1690 = vunpack.c.l.b16 %v434
    %v1691 = vunpack.c.l.b16 %v435
    %v1692 = vunpack.c.l.b16 %v436
    %v1693 = vunpack.c.l.b16 %v437
    %v1694 = vunpack.c.l.b16 %v438
    %v1695 = vunpack.c.l.b16 %v439
    %v1696 = vunpack.c.l.b16 %v440
    %v1697 = vunpack.c.l.b16 %v441
    %v1698 = vunpack.c.l.b16 %v442
    %v1699 = vunpack.c.l.b16 %v443
    %v1700 = vunpack.c.l.b16 %v444
    %v1701 = vunpack.c.l.b16 %v445
    %v1702 = vunpack.c.l.b16 %v446
    %v1703 = vunpack.c.l.b16 %v447
    %v1704 = vunpack.c.l.b16 %v448
    %v1705 = vunpack.c.l.b16 %v449
    %v1706 = vunpack.c.l.b16 %v450
    %v1707 = vunpack.c.l.b16 %v451
    %v1708 = vunpack.c.l.b16 %v452
    %v1709 = vunpack.c.l.b16 %v453
    %v1710 = vunpack.c.l.b16 %v454
    %v1711 = vunpack.c.l.b16 %v455
    %v1712 = vunpack.c.l.b16 %v456
    %v1713 = vunpack.c.l.b16 %v457
    %v1714 = vunpack.c.l.b16 %v458
    %v1715 = vunpack.c.l.b16 %v459
    %v1716 = vunpack.c.l.b16 %v460
    %v1717 = vunpack.c.l.b16 %v461
    %v1718 = vunpack.c.l.b16 %v462
    %v1719 = vunpack.c.l.b16 %v463
    %v1720 = vunpack.c.l.b16 %v464
    %v1721 = vunpack.c.l.b16 %v465
    %v1722 = vunpack.c.l.b16 %v466
    %v1723 = vunpack.c.l.b16 %v467
    %v1724 = vunpack.c.l.b16 %v468
    %v1725 = vunpack.c.l.b16 %v469
    %v1726 = vunpack.c.l.b16 %v470
    %v1727 = vunpack.c.l.b16 %v471
    %v1728 = vunpack.c.l.b16 %v472
    %v1729 = vunpack.c.l.b16 %v473
    %v1730 = vunpack.c.l.b16 %v474
    %v1731 = vunpack.c.l.b16 %v475
    %v1732 = vunpack.c.l.b16 %v476
    %v1733 = vunpack.c.l.b16 %v477
    %v1734 = vunpack.c.l.b16 %v478
    %v1735 = vunpack.c.l.b16 %v479
    %v1736 = vunpack.c.l.b16 %v480
    %v1737 = vunpack.c.l.b16 %v481
    %v1738 = vunpack.c.l.b16 %v482
    %v1739 = vunpack.c.l.b16 %v483
    %v1740 = vunpack.c.l.b16 %v484
    %v1741 = vunpack.c.l.b16 %v485
    %v1742 = vunpack.c.l.b16 %v486
    %v1743 = vunpack.c.l.b16 %v487
    %v1744 = vunpack.c.l.b16 %v488
    %v1745 = vunpack.c.l.b16 %v489
    %v1746 = vunpack.c.l.b16 %v490
    %v1747 = vunpack.c.l.b16 %v491
    %v1748 = vunpack.c.l.b16 %v492
    %v1749 = vunpack.c.l.b16 %v493
    %v1750 = vunpack.c.l.b16 %v494
    %v1751 = vunpack.c.l.b16 %v495
    %v1752 = vunpack.c.l.b16 %v496
    %v1753 = vunpack.c.l.b16 %v497
    %v1754 = vunpack.c.l.b16 %v498
    %v1755 = vunpack.c.l.b16 %v499
    %v1756 = vunpack.c.l.b16 %v500
    %v1757 = vunpack.c.l.b16 %v501
    %v1758 = vunpack.c.l.b16 %v502
    %v1759 = vunpack.c.l.b16 %v503
    %v1760 = vunpack.c.l.b16 %v504
    %v1761 = vunpack.c.l.b16 %v505
    %v1762 = vunpack.c.l.b16 %v506
    %v1763 = vunpack.c.l.b16 %v507
    %v1764 = vunpack.c.l.b16 %v508
    %v1765 = vunpack.c.l.b16 %v509
    %v1766 = vunpack.c.l.b16 %v510
    %v1767 = vunpack.c.l.b16 %v511
    %v1768 = vunpack.c.l.b16 %v512
    %v1769 = vunpack.c.l.b16 %v513
    %v1770 = vunpack.c.l.b16 %v514
    %v1771 = vunpack.c.l.b16 %v515
    %v1772 = vunpack.c.l.b16 %v516
    %v1773 = vunpack.c.l.b16 %v517
    %v1774 = vunpack.c.l.b16 %v518
    %v1775 = vunpack.c.l.b16 %v519
    %v1776 = vunpack.c.l.b16 %v520
    %v1777 = vunpack.c.l.b16 %v521
    %v1778 = vunpack.c.l.b16 %v522
    %v1779 = vunpack.c.l.b16 %v523
    %v1780 = vunpack.c.l.b16 %v524
    %v1781 = vunpack.c.l.b16 %v525
    %v1782 = vunpack.c.l.b16 %v526
    %v1783 = vunpack.c.l.b16 %v527
    %v1784 = vunpack.c.l.b16 %v528
    %v1785 = vunpack.c.l.b16 %v529
    %v1786 = vunpack.c.l.b16 %v530
    %v1787 = vunpack.c.l.b16 %v531
    %v1788 = vunpack.c.l.b16 %v532
    %v1789 = vunpack.c.l.b16 %v533
    %v1790 = vunpack.c.l.b16 %v534
    %v1791 = vunpack.c.l.b16 %v535
    %v1792 = vunpack.c.l.b16 %v536
    %v1793 = vunpack.c.l.b16 %v537
    %v1794 = vunpack.c.l.b16 %v538
    %v1795 = vpack.c.b16 %v1284, %v1283
    %v1796 = vpack.c.b16 %v1286, %v1285
    %v1797 = vpack.c.b16 %v1288, %v1287
    %v1798 = vpack.c.b16 %v1290, %v1289
    %v1799 = vpack.c.b16 %v1292, %v1291
    %v1800 = vpack.c.b16 %v1294, %v1293
    %v1801 = vpack.c.b16 %v1296, %v1295
    %v1802 = vpack.c.b16 %v1298, %v1297
    %v1803 = vpack.c.b16 %v1300, %v1299
    %v1804 = vpack.c.b16 %v1302, %v1301
    %v1805 = vpack.c.b16 %v1304, %v1303
    %v1806 = vpack.c.b16 %v1306, %v1305
    %v1807 = vpack.c.b16 %v1308, %v1307
    %v1808 = vpack.c.b16 %v1310, %v1309
    %v1809 = vpack.c.b16 %v1312, %v1311
    %v1810 = vpack.c.b16 %v1314, %v1313
    %v1811 = vpack.c.b16 %v1316, %v1315
    %v1812 = vpack.c.b16 %v1318, %v1317
    %v1813 = vpack.c.b16 %v1320, %v1319
    %v1814 = vpack.c.b16 %v1322, %v1321
    %v1815 = vpack.c.b16 %v1324, %v1323
    %v1816 = vpack.c.b16 %v1326, %v1325
    %v1817 = vpack.c.b16 %v1328, %v1327
    %v1818 = vpack.c.b16 %v1330, %v1329
    %v1819 = vpack.c.b16 %v1332, %v1331
    %v1820 = vpack.c.b16 %v1334, %v1333
    %v1821 = vpack.c.b16 %v1336, %v1335
    %v1822 = vpack.c.b16 %v1338, %v1337
    %v1823 = vpack.c.b16 %v1340, %v1339
    %v1824 = vpack.c.b16 %v1342, %v1341
    %v1825 = vpack.c.b16 %v1344, %v1343
    %v1826 = vpack.c.b16 %v1346, %v1345
    %v1827 = vpack.c.b16 %v1348, %v1347
    %v1828 = vpack.c.b16 %v1350, %v1349
    %v1829 = vpack.c.b16 %v1352, %v1351
    %v1830 = vpack.c.b16 %v1354, %v1353
    %v1831 = vpack.c.b16 %v1356, %v1355
    %v1832 = vpack.c.b16 %v1358, %v1357
    %v1833 = vpack.c.b16 %v1360, %v1359
    %v1834 = vpack.c.b16 %v1362, %v1361
    %v1835 = vpack.c.b16 %v1364, %v1363
    %v1836 = vpack.c.b16 %v1366, %v1365
    %v1837 = vpack.c.b16 %v1368, %v1367
    %v1838 = vpack.c.b16 %v1370, %v1369
    %v1839 = vpack.c.b16 %v1372, %v1371
    %v1840 = vpack.c.b16 %v1374, %v1373
    %v1841 = vpack.c.b16 %v1376, %v1375
    %v1842 = vpack.c.b16 %v1378, %v1377
    %v1843 = vpack.c.b16 %v1380, %v1379
    %v1844 = vpack.c.b16 %v1382, %v1381
    %v1845 = vpack.c.b16 %v1384, %v1383
    %v1846 = vpack.c.b16 %v1386, %v1385
    %v1847 = vpack.c.b16 %v1388, %v1387
    %v1848 = vpack.c.b16 %v1390, %v1389
    %v1849 = vpack.c.b16 %v1392, %v1391
    %v1850 = vpack.c.b16 %v1394, %v1393
    %v1851 = vpack.c.b16 %v1396, %v1395
    %v1852 = vpack.c.b16 %v1398, %v1397
    %v1853 = vpack.c.b16 %v1400, %v1399
    %v1854 = vpack.c.b16 %v1402, %v1401
    %v1855 = vpack.c.b16 %v1404, %v1403
    %v1856 = vpack.c.b16 %v1406, %v1405
    %v1857 = vpack.c.b16 %v1408, %v1407
    %v1858 = vpack.c.b16 %v1410, %v1409
    %v1859 = vpack.c.b16 %v1412, %v1411
    %v1860 = vpack.c.b16 %v1414, %v1413
    %v1861 = vpack.c.b16 %v1416, %v1415
    %v1862 = vpack.c.b16 %v1418, %v1417
    %v1863 = vpack.c.b16 %v1420, %v1419
    %v1864 = vpack.c.b16 %v1422, %v1421
    %v1865 = vpack.c.b16 %v1424, %v1423
    %v1866 = vpack.c.b16 %v1426, %v1425
    %v1867 = vpack.c.b16 %v1428, %v1427
    %v1868 = vpack.c.b16 %v1430, %v1429
    %v1869 = vpack.c.b16 %v1432, %v1431
    %v1870 = vpack.c.b16 %v1434, %v1433
    %v1871 = vpack.c.b16 %v1436, %v1435
    %v1872 = vpack.c.b16 %v1438, %v1437
    %v1873 = vpack.c.b16 %v1440, %v1439
    %v1874 = vpack.c.b16 %v1442, %v1441
    %v1875 = vpack.c.b16 %v1444, %v1443
    %v1876 = vpack.c.b16 %v1446, %v1445
    %v1877 = vpack.c.b16 %v1448, %v1447
    %v1878 = vpack.c.b16 %v1450, %v1449
    %v1879 = vpack.c.b16 %v1452, %v1451
    %v1880 = vpack.c.b16 %v1454, %v1453
    %v1881 = vpack.c.b16 %v1456, %v1455
    %v1882 = vpack.c.b16 %v1458, %v1457
    %v1883 = vpack.c.b16 %v1460, %v1459
    %v1884 = vpack.c.b16 %v1462, %v1461
    %v1885 = vpack.c.b16 %v1464, %v1463
    %v1886 = vpack.c.b16 %v1466, %v1465
    %v1887 = vpack.c.b16 %v1468, %v1467
    %v1888 = vpack.c.b16 %v1470, %v1469
    %v1889 = vpack.c.b16 %v1472, %v1471
    %v1890 = vpack.c.b16 %v1474, %v1473
    %v1891 = vpack.c.b16 %v1476, %v1475
    %v1892 = vpack.c.b16 %v1478, %v1477
    %v1893 = vpack.c.b16 %v1480, %v1479
    %v1894 = vpack.c.b16 %v1482, %v1481
    %v1895 = vpack.c.b16 %v1484, %v1483
    %v1896 = vpack.c.b16 %v1486, %v1485
    %v1897 = vpack.c.b16 %v1488, %v1487
    %v1898 = vpack.c.b16 %v1490, %v1489
    %v1899 = vpack.c.b16 %v1492, %v1491
    %v1900 = vpack.c.b16 %v1494, %v1493
    %v1901 = vpack.c.b16 %v1496, %v1495
    %v1902 = vpack.c.b16 %v1498, %v1497
    %v1903 = vpack.c.b16 %v1500, %v1499
    %v1904 = vpack.c.b16 %v1502, %v1501
    %v1905 = vpack.c.b16 %v1504, %v1503
    %v1906 = vpack.c.b16 %v1506, %v1505
    %v1907 = vpack.c.b16 %v1508, %v1507
    %v1908 = vpack.c.b16 %v1510, %v1509
    %v1909 = vpack.c.b16 %v1512, %v1511
    %v1910 = vpack.c.b16 %v1514, %v1513
    %v1911 = vpack.c.b16 %v1516, %v1515
    %v1912 = vpack.c.b16 %v1518, %v1517
    %v1913 = vpack.c.b16 %v1520, %v1519
    %v1914 = vpack.c.b16 %v1522, %v1521
    %v1915 = vpack.c.b16 %v1524, %v1523
    %v1916 = vpack.c.b16 %v1526, %v1525
    %v1917 = vpack.c.b16 %v1528, %v1527
    %v1918 = vpack.c.b16 %v1530, %v1529
    %v1919 = vpack.c.b16 %v1532, %v1531
    %v1920 = vpack.c.b16 %v1534, %v1533
    %v1921 = vpack.c.b16 %v1536, %v1535
    %v1922 = vpack.c.b16 %v1538, %v1537
    %v1923 = vpack.c.b16 %v1540, %v1539
    %v1924 = vpack.c.b16 %v1542, %v1541
    %v1925 = vpack.c.b16 %v1544, %v1543
    %v1926 = vpack.c.b16 %v1546, %v1545
    %v1927 = vpack.c.b16 %v1548, %v1547
    %v1928 = vpack.c.b16 %v1550, %v1549
    %v1929 = vpack.c.b16 %v1552, %v1551
    %v1930 = vpack.c.b16 %v1554, %v1553
    %v1931 = vpack.c.b16 %v1556, %v1555
    %v1932 = vpack.c.b16 %v1558, %v1557
    %v1933 = vpack.c.b16 %v1560, %v1559
    %v1934 = vpack.c.b16 %v1562, %v1561
    %v1935 = vpack.c.b16 %v1564, %v1563
    %v1936 = vpack.c.b16 %v1566, %v1565
    %v1937 = vpack.c.b16 %v1568, %v1567
    %v1938 = vpack.c.b16 %v1570, %v1569
    %v1939 = vpack.c.b16 %v1572, %v1571
    %v1940 = vpack.c.b16 %v1574, %v1573
    %v1941 = vpack.c.b16 %v1576, %v1575
    %v1942 = vpack.c.b16 %v1578, %v1577
    %v1943 = vpack.c.b16 %v1580, %v1579
    %v1944 = vpack.c.b16 %v1582, %v1581
    %v1945 = vpack.c.b16 %v1584, %v1583
    %v1946 = vpack.c.b16 %v1586, %v1585
    %v1947 = vpack.c.b16 %v1588, %v1587
    %v1948 = vpack.c.b16 %v1590, %v1589
    %v1949 = vpack.c.b16 %v1592, %v1591
    %v1950 = vpack.c.b16 %v1594, %v1593
    %v1951 = vpack.c.b16 %v1596, %v1595
    %v1952 = vpack.c.b16 %v1598, %v1597
    %v1953 = vpack.c.b16 %v1600, %v1599
    %v1954 = vpack.c.b16 %v1602, %v1601
    %v1955 = vpack.c.b16 %v1604, %v1603
    %v1956 = vpack.c.b16 %v1606, %v1605
    %v1957 = vpack.c.b16 %v1608, %v1607
    %v1958 = vpack.c.b16 %v1610, %v1609
    %v1959 = vpack.c.b16 %v1612, %v1611
    %v1960 = vpack.c.b16 %v1614, %v1613
    %v1961 = vpack.c.b16 %v1616, %v1615
    %v1962 = vpack.c.b16 %v1618, %v1617
    %v1963 = vpack.c.b16 %v1620, %v1619
    %v1964 = vpack.c.b16 %v1622, %v1621
    %v1965 = vpack.c.b16 %v1624, %v1623
    %v1966 = vpack.c.b16 %v1626, %v1625
    %v1967 = vpack.c.b16 %v1628, %v1627
    %v1968 = vpack.c.b16 %v1630, %v1629
    %v1969 = vpack.c.b16 %v1632, %v1631
    %v1970 = vpack.c.b16 %v1634, %v1633
    %v1971 = vpack.c.b16 %v1636, %v1635
    %v1972 = vpack.c.b16 %v1638, %v1637
    %v1973 = vpack.c.b16 %v1640, %v1639
    %v1974 = vpack.c.b16 %v1642, %v1641
    %v1975 = vpack.c.b16 %v1644, %v1643
    %v1976 = vpack.c.b16 %v1646, %v1645
    %v1977 = vpack.c.b16 %v1648, %v1647
    %v1978 = vpack.c.b16 %v1650, %v1649
    %v1979 = vpack.c.b16 %v1652, %v1651
    %v1980 = vpack.c.b16 %v1654, %v1653
    %v1981 = vpack.c.b16 %v1656, %v1655
    %v1982 = vpack.c.b16 %v1658, %v1657
    %v1983 = vpack.c.b16 %v1660, %v1659
    %v1984 = vpack.c.b16 %v1662, %v1661
    %v1985 = vpack.c.b16 %v1664, %v1663
    %v1986 = vpack.c.b16 %v1666, %v1665
    %v1987 = vpack.c.b16 %v1668, %v1667
    %v1988 = vpack.c.b16 %v1670, %v1669
    %v1989 = vpack.c.b16 %v1672, %v1671
    %v1990 = vpack.c.b16 %v1674, %v1673
    %v1991 = vpack.c.b16 %v1676, %v1675
    %v1992 = vpack.c.b16 %v1678, %v1677
    %v1993 = vpack.c.b16 %v1680, %v1679
    %v1994 = vpack.c.b16 %v1682, %v1681
    %v1995 = vpack.c.b16 %v1684, %v1683
    %v1996 = vpack.c.b16 %v1686, %v1685
    %v1997 = vpack.c.b16 %v1688, %v1687
    %v1998 = vpack.c.b16 %v1690, %v1689
    %v1999 = vpack.c.b16 %v1692, %v1691
    %v2000 = vpack.c.b16 %v1694, %v1693
    %v2001 = vpack.c.b16 %v1696, %v1695
    %v2002 = vpack.c.b16 %v1698, %v1697
    %v2003 = vpack.c.b16 %v1700, %v1699
    %v2004 = vpack.c.b16 %v1702, %v1701
    %v2005 = vpack.c.b16 %v1704, %v1703
    %v2006 = vpack.c.b16 %v1706, %v1705
    %v2007 = vpack.c.b16 %v1708, %v1707
    %v2008 = vpack.c.b16 %v1710, %v1709
    %v2009 = vpack.c.b16 %v1712, %v1711
    %v2010 = vpack.c.b16 %v1714, %v1713
    %v2011 = vpack.c.b16 %v1716, %v1715
    %v2012 = vpack.c.b16 %v1718, %v1717
    %v2013 = vpack.c.b16 %v1720, %v1719
    %v2014 = vpack.c.b16 %v1722, %v1721
    %v2015 = vpack.c.b16 %v1724, %v1723
    %v2016 = vpack.c.b16 %v1726, %v1725
    %v2017 = vpack.c.b16 %v1728, %v1727
    %v2018 = vpack.c.b16 %v1730, %v1729
    %v2019 = vpack.c.b16 %v1732, %v1731
    %v2020 = vpack.c.b16 %v1734, %v1733
    %v2021 = vpack.c.b16 %v1736, %v1735
    %v2022 = vpack.c.b16 %v1738, %v1737
    %v2023 = vpack.c.b16 %v1740, %v1739
    %v2024 = vpack.c.b16 %v1742, %v1741
    %v2025 = vpack.c.b16 %v1744, %v1743
    %v2026 = vpack.c.b16 %v1746, %v1745
    %v2027 = vpack.c.b16 %v1748, %v1747
    %v2028 = vpack.c.b16 %v1750, %v1749
    %v2029 = vpack.c.b16 %v1752, %v1751
    %v2030 = vpack.c.b16 %v1754, %v1753
    %v2031 = vpack.c.b16 %v1756, %v1755
    %v2032 = vpack.c.b16 %v1758, %v1757
    %v2033 = vpack.c.b16 %v1760, %v1759
    %v2034 = vpack.c.b16 %v1762, %v1761
    %v2035 = vpack.c.b16 %v1764, %v1763
    %v2036 = vpack.c.b16 %v1766, %v1765
    %v2037 = vpack.c.b16 %v1768, %v1767
    %v2038 = vpack.c.b16 %v1770, %v1769
    %v2039 = vpack.c.b16 %v1772, %v1771
    %v2040 = vpack.c.b16 %v1774, %v1773
    %v2041 = vpack.c.b16 %v1776, %v1775
    %v2042 = vpack.c.b16 %v1778, %v1777
    %v2043 = vpack.c.b16 %v1780, %v1779
    %v2044 = vpack.c.b16 %v1782, %v1781
    %v2045 = vpack.c.b16 %v1784, %v1783
    %v2046 = vpack.c.b16 %v1786, %v1785
    %v2047 = vpack.c.b16 %v1788, %v1787
    %v2048 = vpack.c.b16 %v1790, %v1789
    %v2049 = vpack.c.b16 %v1792, %v1791
    %v2050 = vpack.c.b16 %v1794, %v1793
    %2307 = vmatprep.subr.bf16.mxu0 0
    %2308 = vmatpush1.bf16.msra.mxu0 %v1802
    %2309 = vmatprep.subr.bf16.mxu0 0
    %2310 = vmatpush1.bf16.msra.mxu0 %v1801
    %2311 = vmatprep.subr.bf16.mxu0 0
    %2312 = vmatpush1.bf16.msra.mxu0 %v1800
    %2313 = vmatprep.subr.bf16.mxu0 0
    %2314 = vmatpush1.bf16.msra.mxu0 %v1799
    %2315 = vmatprep.subr.bf16.mxu0 0
    %2316 = vmatpush1.bf16.msra.mxu0 %v1798
    %2317 = vmatprep.subr.bf16.mxu0 0
    %2318 = vmatpush1.bf16.msra.mxu0 %v1797
    %2319 = vmatprep.subr.bf16.mxu0 0
    %2320 = vmatpush1.bf16.msra.mxu0 %v1796
    %2321 = vmatprep.subr.bf16.mxu0 0
    %2322 = vmatpush1.bf16.msra.mxu0 %v1795
    %2323 = vmatprep.subr.bf16.mxu0 0
    %2324 = vmatpush2.bf16.msra.mxu0 %v1810
    %2325 = vmatprep.subr.bf16.mxu0 0
    %2326 = vmatpush2.bf16.msra.mxu0 %v1809
    %2327 = vmatprep.subr.bf16.mxu0 0
    %2328 = vmatpush2.bf16.msra.mxu0 %v1808
    %2329 = vmatprep.subr.bf16.mxu0 0
    %2330 = vmatpush2.bf16.msra.mxu0 %v1807
    %2331 = vmatprep.subr.bf16.mxu0 0
    %2332 = vmatpush2.bf16.msra.mxu0 %v1806
    %2333 = vmatprep.subr.bf16.mxu0 0
    %2334 = vmatpush2.bf16.msra.mxu0 %v1805
    %2335 = vmatprep.subr.bf16.mxu0 0
    %2336 = vmatpush2.bf16.msra.mxu0 %v1804
    %2337 = vmatprep.subr.bf16.mxu0 0
    %2338 = vmatpush2.bf16.msra.mxu0 %v1803
    %2339 = vmatprep.mubr.bf16.mxu0 %v580
    %2340 = vmatmul.mubr.bf16.gmra.mxu0 %v566
    %v2341 = vpop.f32.mrf.mxu0
    %v2342 = vadd.f32 0.0, %v2341
    %v2343 = vpop.f32.mrf.mxu0
    %v2344 = vpop.f32.mrf.mxu0
    %v2345 = vpop.f32.mrf.mxu0
    %2346 = vdwg.mxu0
    %2347 = vmatprep.subr.bf16.mxu0 0
    %2348 = vmatpush1.bf16.msra.mxu0 %v1818
    %2349 = vmatprep.subr.bf16.mxu0 0
    %2350 = vmatpush1.bf16.msra.mxu0 %v1817
    %2351 = vmatprep.subr.bf16.mxu0 0
    %2352 = vmatpush1.bf16.msra.mxu0 %v1816
    %2353 = vmatprep.subr.bf16.mxu0 0
    %2354 = vmatpush1.bf16.msra.mxu0 %v1815
    %2355 = vmatprep.subr.bf16.mxu0 0
    %2356 = vmatpush1.bf16.msra.mxu0 %v1814
    %2357 = vmatprep.subr.bf16.mxu0 0
    %2358 = vmatpush1.bf16.msra.mxu0 %v1813
    %2359 = vmatprep.subr.bf16.mxu0 0
    %2360 = vmatpush1.bf16.msra.mxu0 %v1812
    %2361 = vmatprep.subr.bf16.mxu0 0
    %2362 = vmatpush1.bf16.msra.mxu0 %v1811
    %2363 = vmatprep.subr.bf16.mxu0 0
    %2364 = vmatpush2.bf16.msra.mxu0 %v1826
    %2365 = vmatprep.subr.bf16.mxu0 0
    %2366 = vmatpush2.bf16.msra.mxu0 %v1825
    %2367 = vmatprep.subr.bf16.mxu0 0
    %2368 = vmatpush2.bf16.msra.mxu0 %v1824
    %2369 = vmatprep.subr.bf16.mxu0 0
    %2370 = vmatpush2.bf16.msra.mxu0 %v1823
    %2371 = vmatprep.subr.bf16.mxu0 0
    %2372 = vmatpush2.bf16.msra.mxu0 %v1822
    %2373 = vmatprep.subr.bf16.mxu0 0
    %2374 = vmatpush2.bf16.msra.mxu0 %v1821
    %2375 = vmatprep.subr.bf16.mxu0 0
    %2376 = vmatpush2.bf16.msra.mxu0 %v1820
    %2377 = vmatprep.subr.bf16.mxu0 0
    %2378 = vmatpush2.bf16.msra.mxu0 %v1819
    %2379 = vmatprep.mubr.bf16.mxu0 %v590
    %2380 = vmatmul.mubr.bf16.gmra.mxu0 %v588
    %v2381 = vpop.f32.mrf.mxu0
    %v2382 = vadd.f32 %v2342, %v2381
    %v2383 = vpop.f32.mrf.mxu0
    %v2384 = vpop.f32.mrf.mxu0
    %v2385 = vpop.f32.mrf.mxu0
    %2386 = vdwg.mxu0
    %2387 = vmatprep.subr.bf16.mxu0 0
    %2388 = vmatpush1.bf16.msra.mxu0 %v1834
    %2389 = vmatprep.subr.bf16.mxu0 0
    %2390 = vmatpush1.bf16.msra.mxu0 %v1833
    %2391 = vmatprep.subr.bf16.mxu0 0
    %2392 = vmatpush1.bf16.msra.mxu0 %v1832
    %2393 = vmatprep.subr.bf16.mxu0 0
    %2394 = vmatpush1.bf16.msra.mxu0 %v1831
    %2395 = vmatprep.subr.bf16.mxu0 0
    %2396 = vmatpush1.bf16.msra.mxu0 %v1830
    %2397 = vmatprep.subr.bf16.mxu0 0
    %2398 = vmatpush1.bf16.msra.mxu0 %v1829
    %2399 = vmatprep.subr.bf16.mxu0 0
    %2400 = vmatpush1.bf16.msra.mxu0 %v1828
    %2401 = vmatprep.subr.bf16.mxu0 0
    %2402 = vmatpush1.bf16.msra.mxu0 %v1827
    %2403 = vmatprep.subr.bf16.mxu0 0
    %2404 = vmatpush2.bf16.msra.mxu0 %v1842
    %2405 = vmatprep.subr.bf16.mxu0 0
    %2406 = vmatpush2.bf16.msra.mxu0 %v1841
    %2407 = vmatprep.subr.bf16.mxu0 0
    %2408 = vmatpush2.bf16.msra.mxu0 %v1840
    %2409 = vmatprep.subr.bf16.mxu0 0
    %2410 = vmatpush2.bf16.msra.mxu0 %v1839
    %2411 = vmatprep.subr.bf16.mxu0 0
    %2412 = vmatpush2.bf16.msra.mxu0 %v1838
    %2413 = vmatprep.subr.bf16.mxu0 0
    %2414 = vmatpush2.bf16.msra.mxu0 %v1837
    %2415 = vmatprep.subr.bf16.mxu0 0
    %2416 = vmatpush2.bf16.msra.mxu0 %v1836
    %2417 = vmatprep.subr.bf16.mxu0 0
    %2418 = vmatpush2.bf16.msra.mxu0 %v1835
    %2419 = vmatprep.mubr.bf16.mxu0 %v587
    %2420 = vmatmul.mubr.bf16.gmra.mxu0 %v573
    %v2421 = vpop.f32.mrf.mxu0
    %v2422 = vadd.f32 %v2382, %v2421
    %v2423 = vpop.f32.mrf.mxu0
    %v2424 = vpop.f32.mrf.mxu0
    %v2425 = vpop.f32.mrf.mxu0
    %2426 = vdwg.mxu0
    %2427 = vmatprep.subr.bf16.mxu0 0
    %2428 = vmatpush1.bf16.msra.mxu0 %v1850
    %2429 = vmatprep.subr.bf16.mxu0 0
    %2430 = vmatpush1.bf16.msra.mxu0 %v1849
    %2431 = vmatprep.subr.bf16.mxu0 0
    %2432 = vmatpush1.bf16.msra.mxu0 %v1848
    %2433 = vmatprep.subr.bf16.mxu0 0
    %2434 = vmatpush1.bf16.msra.mxu0 %v1847
    %2435 = vmatprep.subr.bf16.mxu0 0
    %2436 = vmatpush1.bf16.msra.mxu0 %v1846
    %2437 = vmatprep.subr.bf16.mxu0 0
    %2438 = vmatpush1.bf16.msra.mxu0 %v1845
    %2439 = vmatprep.subr.bf16.mxu0 0
    %2440 = vmatpush1.bf16.msra.mxu0 %v1844
    %2441 = vmatprep.subr.bf16.mxu0 0
    %2442 = vmatpush1.bf16.msra.mxu0 %v1843
    %2443 = vmatprep.subr.bf16.mxu0 0
    %2444 = vmatpush2.bf16.msra.mxu0 %v1858
    %2445 = vmatprep.subr.bf16.mxu0 0
    %2446 = vmatpush2.bf16.msra.mxu0 %v1857
    %2447 = vmatprep.subr.bf16.mxu0 0
    %2448 = vmatpush2.bf16.msra.mxu0 %v1856
    %2449 = vmatprep.subr.bf16.mxu0 0
    %2450 = vmatpush2.bf16.msra.mxu0 %v1855
    %2451 = vmatprep.subr.bf16.mxu0 0
    %2452 = vmatpush2.bf16.msra.mxu0 %v1854
    %2453 = vmatprep.subr.bf16.mxu0 0
    %2454 = vmatpush2.bf16.msra.mxu0 %v1853
    %2455 = vmatprep.subr.bf16.mxu0 0
    %2456 = vmatpush2.bf16.msra.mxu0 %v1852
    %2457 = vmatprep.subr.bf16.mxu0 0
    %2458 = vmatpush2.bf16.msra.mxu0 %v1851
    %2459 = vmatprep.mubr.bf16.mxu0 %v591
    %2460 = vmatmul.mubr.bf16.gmra.mxu0 %v589
    %v2461 = vpop.f32.mrf.mxu0
    %v2462 = vadd.f32 %v2422, %v2461
    %v2463 = vpop.f32.mrf.mxu0
    %v2464 = vpop.f32.mrf.mxu0
    %v2465 = vpop.f32.mrf.mxu0
    %2466 = vdwg.mxu0
    %2467 = vmatprep.subr.bf16.mxu0 0
    %2468 = vmatpush1.bf16.msra.mxu0 %v1866
    %2469 = vmatprep.subr.bf16.mxu0 0
    %2470 = vmatpush1.bf16.msra.mxu0 %v1865
    %2471 = vmatprep.subr.bf16.mxu0 0
    %2472 = vmatpush1.bf16.msra.mxu0 %v1864
    %2473 = vmatprep.subr.bf16.mxu0 0
    %2474 = vmatpush1.bf16.msra.mxu0 %v1863
    %2475 = vmatprep.subr.bf16.mxu0 0
    %2476 = vmatpush1.bf16.msra.mxu0 %v1862
    %2477 = vmatprep.subr.bf16.mxu0 0
    %2478 = vmatpush1.bf16.msra.mxu0 %v1861
    %2479 = vmatprep.subr.bf16.mxu0 0
    %2480 = vmatpush1.bf16.msra.mxu0 %v1860
    %2481 = vmatprep.subr.bf16.mxu0 0
    %2482 = vmatpush1.bf16.msra.mxu0 %v1859
    %2483 = vmatprep.subr.bf16.mxu0 0
    %2484 = vmatpush2.bf16.msra.mxu0 %v1874
    %2485 = vmatprep.subr.bf16.mxu0 0
    %2486 = vmatpush2.bf16.msra.mxu0 %v1873
    %2487 = vmatprep.subr.bf16.mxu0 0
    %2488 = vmatpush2.bf16.msra.mxu0 %v1872
    %2489 = vmatprep.subr.bf16.mxu0 0
    %2490 = vmatpush2.bf16.msra.mxu0 %v1871
    %2491 = vmatprep.subr.bf16.mxu0 0
    %2492 = vmatpush2.bf16.msra.mxu0 %v1870
    %2493 = vmatprep.subr.bf16.mxu0 0
    %2494 = vmatpush2.bf16.msra.mxu0 %v1869
    %2495 = vmatprep.subr.bf16.mxu0 0
    %2496 = vmatpush2.bf16.msra.mxu0 %v1868
    %2497 = vmatprep.subr.bf16.mxu0 0
    %2498 = vmatpush2.bf16.msra.mxu0 %v1867
    %2499 = vmatprep.mubr.bf16.mxu0 %v629
    %2500 = vmatmul.mubr.bf16.gmra.mxu0 %v615
    %v2501 = vpop.f32.mrf.mxu0
    %v2502 = vadd.f32 %v2462, %v2501
    %v2503 = vpop.f32.mrf.mxu0
    %v2504 = vpop.f32.mrf.mxu0
    %v2505 = vpop.f32.mrf.mxu0
    %2506 = vdwg.mxu0
    %2507 = vmatprep.subr.bf16.mxu0 0
    %2508 = vmatpush1.bf16.msra.mxu0 %v1882
    %2509 = vmatprep.subr.bf16.mxu0 0
    %2510 = vmatpush1.bf16.msra.mxu0 %v1881
    %2511 = vmatprep.subr.bf16.mxu0 0
    %2512 = vmatpush1.bf16.msra.mxu0 %v1880
    %2513 = vmatprep.subr.bf16.mxu0 0
    %2514 = vmatpush1.bf16.msra.mxu0 %v1879
    %2515 = vmatprep.subr.bf16.mxu0 0
    %2516 = vmatpush1.bf16.msra.mxu0 %v1878
    %2517 = vmatprep.subr.bf16.mxu0 0
    %2518 = vmatpush1.bf16.msra.mxu0 %v1877
    %2519 = vmatprep.subr.bf16.mxu0 0
    %2520 = vmatpush1.bf16.msra.mxu0 %v1876
    %2521 = vmatprep.subr.bf16.mxu0 0
    %2522 = vmatpush1.bf16.msra.mxu0 %v1875
    %2523 = vmatprep.subr.bf16.mxu0 0
    %2524 = vmatpush2.bf16.msra.mxu0 %v1890
    %2525 = vmatprep.subr.bf16.mxu0 0
    %2526 = vmatpush2.bf16.msra.mxu0 %v1889
    %2527 = vmatprep.subr.bf16.mxu0 0
    %2528 = vmatpush2.bf16.msra.mxu0 %v1888
    %2529 = vmatprep.subr.bf16.mxu0 0
    %2530 = vmatpush2.bf16.msra.mxu0 %v1887
    %2531 = vmatprep.subr.bf16.mxu0 0
    %2532 = vmatpush2.bf16.msra.mxu0 %v1886
    %2533 = vmatprep.subr.bf16.mxu0 0
    %2534 = vmatpush2.bf16.msra.mxu0 %v1885
    %2535 = vmatprep.subr.bf16.mxu0 0
    %2536 = vmatpush2.bf16.msra.mxu0 %v1884
    %2537 = vmatprep.subr.bf16.mxu0 0
    %2538 = vmatpush2.bf16.msra.mxu0 %v1883
    %2539 = vmatprep.mubr.bf16.mxu0 %v639
    %2540 = vmatmul.mubr.bf16.gmra.mxu0 %v637
    %v2541 = vpop.f32.mrf.mxu0
    %v2542 = vadd.f32 %v2502, %v2541
    %v2543 = vpop.f32.mrf.mxu0
    %v2544 = vpop.f32.mrf.mxu0
    %v2545 = vpop.f32.mrf.mxu0
    %2546 = vdwg.mxu0
    %2547 = vmatprep.subr.bf16.mxu0 0
    %2548 = vmatpush1.bf16.msra.mxu0 %v1898
    %2549 = vmatprep.subr.bf16.mxu0 0
    %2550 = vmatpush1.bf16.msra.mxu0 %v1897
    %2551 = vmatprep.subr.bf16.mxu0 0
    %2552 = vmatpush1.bf16.msra.mxu0 %v1896
    %2553 = vmatprep.subr.bf16.mxu0 0
    %2554 = vmatpush1.bf16.msra.mxu0 %v1895
    %2555 = vmatprep.subr.bf16.mxu0 0
    %2556 = vmatpush1.bf16.msra.mxu0 %v1894
    %2557 = vmatprep.subr.bf16.mxu0 0
    %2558 = vmatpush1.bf16.msra.mxu0 %v1893
    %2559 = vmatprep.subr.bf16.mxu0 0
    %2560 = vmatpush1.bf16.msra.mxu0 %v1892
    %2561 = vmatprep.subr.bf16.mxu0 0
    %2562 = vmatpush1.bf16.msra.mxu0 %v1891
    %2563 = vmatprep.subr.bf16.mxu0 0
    %2564 = vmatpush2.bf16.msra.mxu0 %v1906
    %2565 = vmatprep.subr.bf16.mxu0 0
    %2566 = vmatpush2.bf16.msra.mxu0 %v1905
    %2567 = vmatprep.subr.bf16.mxu0 0
    %2568 = vmatpush2.bf16.msra.mxu0 %v1904
    %2569 = vmatprep.subr.bf16.mxu0 0
    %2570 = vmatpush2.bf16.msra.mxu0 %v1903
    %2571 = vmatprep.subr.bf16.mxu0 0
    %2572 = vmatpush2.bf16.msra.mxu0 %v1902
    %2573 = vmatprep.subr.bf16.mxu0 0
    %2574 = vmatpush2.bf16.msra.mxu0 %v1901
    %2575 = vmatprep.subr.bf16.mxu0 0
    %2576 = vmatpush2.bf16.msra.mxu0 %v1900
    %2577 = vmatprep.subr.bf16.mxu0 0
    %2578 = vmatpush2.bf16.msra.mxu0 %v1899
    %2579 = vmatprep.mubr.bf16.mxu0 %v636
    %2580 = vmatmul.mubr.bf16.gmra.mxu0 %v622
    %v2581 = vpop.f32.mrf.mxu0
    %v2582 = vadd.f32 %v2542, %v2581
    %v2583 = vpop.f32.mrf.mxu0
    %v2584 = vpop.f32.mrf.mxu0
    %v2585 = vpop.f32.mrf.mxu0
    %2586 = vdwg.mxu0
    %2587 = vmatprep.subr.bf16.mxu0 0
    %2588 = vmatpush1.bf16.msra.mxu0 %v1914
    %2589 = vmatprep.subr.bf16.mxu0 0
    %2590 = vmatpush1.bf16.msra.mxu0 %v1913
    %2591 = vmatprep.subr.bf16.mxu0 0
    %2592 = vmatpush1.bf16.msra.mxu0 %v1912
    %2593 = vmatprep.subr.bf16.mxu0 0
    %2594 = vmatpush1.bf16.msra.mxu0 %v1911
    %2595 = vmatprep.subr.bf16.mxu0 0
    %2596 = vmatpush1.bf16.msra.mxu0 %v1910
    %2597 = vmatprep.subr.bf16.mxu0 0
    %2598 = vmatpush1.bf16.msra.mxu0 %v1909
    %2599 = vmatprep.subr.bf16.mxu0 0
    %2600 = vmatpush1.bf16.msra.mxu0 %v1908
    %2601 = vmatprep.subr.bf16.mxu0 0
    %2602 = vmatpush1.bf16.msra.mxu0 %v1907
    %2603 = vmatprep.subr.bf16.mxu0 0
    %2604 = vmatpush2.bf16.msra.mxu0 %v1922
    %2605 = vmatprep.subr.bf16.mxu0 0
    %2606 = vmatpush2.bf16.msra.mxu0 %v1921
    %2607 = vmatprep.subr.bf16.mxu0 0
    %2608 = vmatpush2.bf16.msra.mxu0 %v1920
    %2609 = vmatprep.subr.bf16.mxu0 0
    %2610 = vmatpush2.bf16.msra.mxu0 %v1919
    %2611 = vmatprep.subr.bf16.mxu0 0
    %2612 = vmatpush2.bf16.msra.mxu0 %v1918
    %2613 = vmatprep.subr.bf16.mxu0 0
    %2614 = vmatpush2.bf16.msra.mxu0 %v1917
    %2615 = vmatprep.subr.bf16.mxu0 0
    %2616 = vmatpush2.bf16.msra.mxu0 %v1916
    %2617 = vmatprep.subr.bf16.mxu0 0
    %2618 = vmatpush2.bf16.msra.mxu0 %v1915
    %2619 = vmatprep.mubr.bf16.mxu0 %v640
    %2620 = vmatmul.mubr.bf16.gmra.mxu0 %v638
    %v2621 = vpop.f32.mrf.mxu0
    %v2622 = vadd.f32 %v2582, %v2621
    %v2623 = vpop.f32.mrf.mxu0
    %v2624 = vpop.f32.mrf.mxu0
    %v2625 = vpop.f32.mrf.mxu0
    %2626 = vdwg.mxu0
    %2627 = vmatprep.subr.bf16.mxu0 0
    %2628 = vmatpush1.bf16.msra.mxu0 %v1930
    %2629 = vmatprep.subr.bf16.mxu0 0
    %2630 = vmatpush1.bf16.msra.mxu0 %v1929
    %2631 = vmatprep.subr.bf16.mxu0 0
    %2632 = vmatpush1.bf16.msra.mxu0 %v1928
    %2633 = vmatprep.subr.bf16.mxu0 0
    %2634 = vmatpush1.bf16.msra.mxu0 %v1927
    %2635 = vmatprep.subr.bf16.mxu0 0
    %2636 = vmatpush1.bf16.msra.mxu0 %v1926
    %2637 = vmatprep.subr.bf16.mxu0 0
    %2638 = vmatpush1.bf16.msra.mxu0 %v1925
    %2639 = vmatprep.subr.bf16.mxu0 0
    %2640 = vmatpush1.bf16.msra.mxu0 %v1924
    %2641 = vmatprep.subr.bf16.mxu0 0
    %2642 = vmatpush1.bf16.msra.mxu0 %v1923
    %2643 = vmatprep.subr.bf16.mxu0 0
    %2644 = vmatpush2.bf16.msra.mxu0 %v1938
    %2645 = vmatprep.subr.bf16.mxu0 0
    %2646 = vmatpush2.bf16.msra.mxu0 %v1937
    %2647 = vmatprep.subr.bf16.mxu0 0
    %2648 = vmatpush2.bf16.msra.mxu0 %v1936
    %2649 = vmatprep.subr.bf16.mxu0 0
    %2650 = vmatpush2.bf16.msra.mxu0 %v1935
    %2651 = vmatprep.subr.bf16.mxu0 0
    %2652 = vmatpush2.bf16.msra.mxu0 %v1934
    %2653 = vmatprep.subr.bf16.mxu0 0
    %2654 = vmatpush2.bf16.msra.mxu0 %v1933
    %2655 = vmatprep.subr.bf16.mxu0 0
    %2656 = vmatpush2.bf16.msra.mxu0 %v1932
    %2657 = vmatprep.subr.bf16.mxu0 0
    %2658 = vmatpush2.bf16.msra.mxu0 %v1931
    %2659 = vmatprep.mubr.bf16.mxu0 %v678
    %2660 = vmatmul.mubr.bf16.gmra.mxu0 %v664
    %v2661 = vpop.f32.mrf.mxu0
    %v2662 = vadd.f32 %v2622, %v2661
    %v2663 = vpop.f32.mrf.mxu0
    %v2664 = vpop.f32.mrf.mxu0
    %v2665 = vpop.f32.mrf.mxu0
    %2666 = vdwg.mxu0
    %2667 = vmatprep.subr.bf16.mxu0 0
    %2668 = vmatpush1.bf16.msra.mxu0 %v1946
    %2669 = vmatprep.subr.bf16.mxu0 0
    %2670 = vmatpush1.bf16.msra.mxu0 %v1945
    %2671 = vmatprep.subr.bf16.mxu0 0
    %2672 = vmatpush1.bf16.msra.mxu0 %v1944
    %2673 = vmatprep.subr.bf16.mxu0 0
    %2674 = vmatpush1.bf16.msra.mxu0 %v1943
    %2675 = vmatprep.subr.bf16.mxu0 0
    %2676 = vmatpush1.bf16.msra.mxu0 %v1942
    %2677 = vmatprep.subr.bf16.mxu0 0
    %2678 = vmatpush1.bf16.msra.mxu0 %v1941
    %2679 = vmatprep.subr.bf16.mxu0 0
    %2680 = vmatpush1.bf16.msra.mxu0 %v1940
    %2681 = vmatprep.subr.bf16.mxu0 0
    %2682 = vmatpush1.bf16.msra.mxu0 %v1939
    %2683 = vmatprep.subr.bf16.mxu0 0
    %2684 = vmatpush2.bf16.msra.mxu0 %v1954
    %2685 = vmatprep.subr.bf16.mxu0 0
    %2686 = vmatpush2.bf16.msra.mxu0 %v1953
    %2687 = vmatprep.subr.bf16.mxu0 0
    %2688 = vmatpush2.bf16.msra.mxu0 %v1952
    %2689 = vmatprep.subr.bf16.mxu0 0
    %2690 = vmatpush2.bf16.msra.mxu0 %v1951
    %2691 = vmatprep.subr.bf16.mxu0 0
    %2692 = vmatpush2.bf16.msra.mxu0 %v1950
    %2693 = vmatprep.subr.bf16.mxu0 0
    %2694 = vmatpush2.bf16.msra.mxu0 %v1949
    %2695 = vmatprep.subr.bf16.mxu0 0
    %2696 = vmatpush2.bf16.msra.mxu0 %v1948
    %2697 = vmatprep.subr.bf16.mxu0 0
    %2698 = vmatpush2.bf16.msra.mxu0 %v1947
    %2699 = vmatprep.mubr.bf16.mxu0 %v688
    %2700 = vmatmul.mubr.bf16.gmra.mxu0 %v686
    %v2701 = vpop.f32.mrf.mxu0
    %v2702 = vadd.f32 %v2662, %v2701
    %v2703 = vpop.f32.mrf.mxu0
    %v2704 = vpop.f32.mrf.mxu0
    %v2705 = vpop.f32.mrf.mxu0
    %2706 = vdwg.mxu0
    %2707 = vmatprep.subr.bf16.mxu0 0
    %2708 = vmatpush1.bf16.msra.mxu0 %v1962
    %2709 = vmatprep.subr.bf16.mxu0 0
    %2710 = vmatpush1.bf16.msra.mxu0 %v1961
    %2711 = vmatprep.subr.bf16.mxu0 0
    %2712 = vmatpush1.bf16.msra.mxu0 %v1960
    %2713 = vmatprep.subr.bf16.mxu0 0
    %2714 = vmatpush1.bf16.msra.mxu0 %v1959
    %2715 = vmatprep.subr.bf16.mxu0 0
    %2716 = vmatpush1.bf16.msra.mxu0 %v1958
    %2717 = vmatprep.subr.bf16.mxu0 0
    %2718 = vmatpush1.bf16.msra.mxu0 %v1957
    %2719 = vmatprep.subr.bf16.mxu0 0
    %2720 = vmatpush1.bf16.msra.mxu0 %v1956
    %2721 = vmatprep.subr.bf16.mxu0 0
    %2722 = vmatpush1.bf16.msra.mxu0 %v1955
    %2723 = vmatprep.subr.bf16.mxu0 0
    %2724 = vmatpush2.bf16.msra.mxu0 %v1970
    %2725 = vmatprep.subr.bf16.mxu0 0
    %2726 = vmatpush2.bf16.msra.mxu0 %v1969
    %2727 = vmatprep.subr.bf16.mxu0 0
    %2728 = vmatpush2.bf16.msra.mxu0 %v1968
    %2729 = vmatprep.subr.bf16.mxu0 0
    %2730 = vmatpush2.bf16.msra.mxu0 %v1967
    %2731 = vmatprep.subr.bf16.mxu0 0
    %2732 = vmatpush2.bf16.msra.mxu0 %v1966
    %2733 = vmatprep.subr.bf16.mxu0 0
    %2734 = vmatpush2.bf16.msra.mxu0 %v1965
    %2735 = vmatprep.subr.bf16.mxu0 0
    %2736 = vmatpush2.bf16.msra.mxu0 %v1964
    %2737 = vmatprep.subr.bf16.mxu0 0
    %2738 = vmatpush2.bf16.msra.mxu0 %v1963
    %2739 = vmatprep.mubr.bf16.mxu0 %v685
    %2740 = vmatmul.mubr.bf16.gmra.mxu0 %v671
    %v2741 = vpop.f32.mrf.mxu0
    %v2742 = vadd.f32 %v2702, %v2741
    %v2743 = vpop.f32.mrf.mxu0
    %v2744 = vpop.f32.mrf.mxu0
    %v2745 = vpop.f32.mrf.mxu0
    %2746 = vdwg.mxu0
    %2747 = vmatprep.subr.bf16.mxu0 0
    %2748 = vmatpush1.bf16.msra.mxu0 %v1978
    %2749 = vmatprep.subr.bf16.mxu0 0
    %2750 = vmatpush1.bf16.msra.mxu0 %v1977
    %2751 = vmatprep.subr.bf16.mxu0 0
    %2752 = vmatpush1.bf16.msra.mxu0 %v1976
    %2753 = vmatprep.subr.bf16.mxu0 0
    %2754 = vmatpush1.bf16.msra.mxu0 %v1975
    %2755 = vmatprep.subr.bf16.mxu0 0
    %2756 = vmatpush1.bf16.msra.mxu0 %v1974
    %2757 = vmatprep.subr.bf16.mxu0 0
    %2758 = vmatpush1.bf16.msra.mxu0 %v1973
    %2759 = vmatprep.subr.bf16.mxu0 0
    %2760 = vmatpush1.bf16.msra.mxu0 %v1972
    %2761 = vmatprep.subr.bf16.mxu0 0
    %2762 = vmatpush1.bf16.msra.mxu0 %v1971
    %2763 = vmatprep.subr.bf16.mxu0 0
    %2764 = vmatpush2.bf16.msra.mxu0 %v1986
    %2765 = vmatprep.subr.bf16.mxu0 0
    %2766 = vmatpush2.bf16.msra.mxu0 %v1985
    %2767 = vmatprep.subr.bf16.mxu0 0
    %2768 = vmatpush2.bf16.msra.mxu0 %v1984
    %2769 = vmatprep.subr.bf16.mxu0 0
    %2770 = vmatpush2.bf16.msra.mxu0 %v1983
    %2771 = vmatprep.subr.bf16.mxu0 0
    %2772 = vmatpush2.bf16.msra.mxu0 %v1982
    %2773 = vmatprep.subr.bf16.mxu0 0
    %2774 = vmatpush2.bf16.msra.mxu0 %v1981
    %2775 = vmatprep.subr.bf16.mxu0 0
    %2776 = vmatpush2.bf16.msra.mxu0 %v1980
    %2777 = vmatprep.subr.bf16.mxu0 0
    %2778 = vmatpush2.bf16.msra.mxu0 %v1979
    %2779 = vmatprep.mubr.bf16.mxu0 %v689
    %2780 = vmatmul.mubr.bf16.gmra.mxu0 %v687
    %v2781 = vpop.f32.mrf.mxu0
    %v2782 = vadd.f32 %v2742, %v2781
    %v2783 = vpop.f32.mrf.mxu0
    %v2784 = vpop.f32.mrf.mxu0
    %v2785 = vpop.f32.mrf.mxu0
    %2786 = vdwg.mxu0
    %2787 = vmatprep.subr.bf16.mxu0 0
    %2788 = vmatpush1.bf16.msra.mxu0 %v1994
    %2789 = vmatprep.subr.bf16.mxu0 0
    %2790 = vmatpush1.bf16.msra.mxu0 %v1993
    %2791 = vmatprep.subr.bf16.mxu0 0
    %2792 = vmatpush1.bf16.msra.mxu0 %v1992
    %2793 = vmatprep.subr.bf16.mxu0 0
    %2794 = vmatpush1.bf16.msra.mxu0 %v1991
    %2795 = vmatprep.subr.bf16.mxu0 0
    %2796 = vmatpush1.bf16.msra.mxu0 %v1990
    %2797 = vmatprep.subr.bf16.mxu0 0
    %2798 = vmatpush1.bf16.msra.mxu0 %v1989
    %2799 = vmatprep.subr.bf16.mxu0 0
    %2800 = vmatpush1.bf16.msra.mxu0 %v1988
    %2801 = vmatprep.subr.bf16.mxu0 0
    %2802 = vmatpush1.bf16.msra.mxu0 %v1987
    %2803 = vmatprep.subr.bf16.mxu0 0
    %2804 = vmatpush2.bf16.msra.mxu0 %v2002
    %2805 = vmatprep.subr.bf16.mxu0 0
    %2806 = vmatpush2.bf16.msra.mxu0 %v2001
    %2807 = vmatprep.subr.bf16.mxu0 0
    %2808 = vmatpush2.bf16.msra.mxu0 %v2000
    %2809 = vmatprep.subr.bf16.mxu0 0
    %2810 = vmatpush2.bf16.msra.mxu0 %v1999
    %2811 = vmatprep.subr.bf16.mxu0 0
    %2812 = vmatpush2.bf16.msra.mxu0 %v1998
    %2813 = vmatprep.subr.bf16.mxu0 0
    %2814 = vmatpush2.bf16.msra.mxu0 %v1997
    %2815 = vmatprep.subr.bf16.mxu0 0
    %2816 = vmatpush2.bf16.msra.mxu0 %v1996
    %2817 = vmatprep.subr.bf16.mxu0 0
    %2818 = vmatpush2.bf16.msra.mxu0 %v1995
    %2819 = vmatprep.mubr.bf16.mxu0 %v727
    %2820 = vmatmul.mubr.bf16.gmra.mxu0 %v713
    %v2821 = vpop.f32.mrf.mxu0
    %v2822 = vadd.f32 %v2782, %v2821
    %v2823 = vpop.f32.mrf.mxu0
    %v2824 = vpop.f32.mrf.mxu0
    %v2825 = vpop.f32.mrf.mxu0
    %2826 = vdwg.mxu0
    %2827 = vmatprep.subr.bf16.mxu0 0
    %2828 = vmatpush1.bf16.msra.mxu0 %v2010
    %2829 = vmatprep.subr.bf16.mxu0 0
    %2830 = vmatpush1.bf16.msra.mxu0 %v2009
    %2831 = vmatprep.subr.bf16.mxu0 0
    %2832 = vmatpush1.bf16.msra.mxu0 %v2008
    %2833 = vmatprep.subr.bf16.mxu0 0
    %2834 = vmatpush1.bf16.msra.mxu0 %v2007
    %2835 = vmatprep.subr.bf16.mxu0 0
    %2836 = vmatpush1.bf16.msra.mxu0 %v2006
    %2837 = vmatprep.subr.bf16.mxu0 0
    %2838 = vmatpush1.bf16.msra.mxu0 %v2005
    %2839 = vmatprep.subr.bf16.mxu0 0
    %2840 = vmatpush1.bf16.msra.mxu0 %v2004
    %2841 = vmatprep.subr.bf16.mxu0 0
    %2842 = vmatpush1.bf16.msra.mxu0 %v2003
    %2843 = vmatprep.subr.bf16.mxu0 0
    %2844 = vmatpush2.bf16.msra.mxu0 %v2018
    %2845 = vmatprep.subr.bf16.mxu0 0
    %2846 = vmatpush2.bf16.msra.mxu0 %v2017
    %2847 = vmatprep.subr.bf16.mxu0 0
    %2848 = vmatpush2.bf16.msra.mxu0 %v2016
    %2849 = vmatprep.subr.bf16.mxu0 0
    %2850 = vmatpush2.bf16.msra.mxu0 %v2015
    %2851 = vmatprep.subr.bf16.mxu0 0
    %2852 = vmatpush2.bf16.msra.mxu0 %v2014
    %2853 = vmatprep.subr.bf16.mxu0 0
    %2854 = vmatpush2.bf16.msra.mxu0 %v2013
    %2855 = vmatprep.subr.bf16.mxu0 0
    %2856 = vmatpush2.bf16.msra.mxu0 %v2012
    %2857 = vmatprep.subr.bf16.mxu0 0
    %2858 = vmatpush2.bf16.msra.mxu0 %v2011
    %2859 = vmatprep.mubr.bf16.mxu0 %v737
    %2860 = vmatmul.mubr.bf16.gmra.mxu0 %v735
    %v2861 = vpop.f32.mrf.mxu0
    %v2862 = vadd.f32 %v2822, %v2861
    %v2863 = vpop.f32.mrf.mxu0
    %v2864 = vpop.f32.mrf.mxu0
    %v2865 = vpop.f32.mrf.mxu0
    %2866 = vdwg.mxu0
    %2867 = vmatprep.subr.bf16.mxu0 0
    %2868 = vmatpush1.bf16.msra.mxu0 %v2026
    %2869 = vmatprep.subr.bf16.mxu0 0
    %2870 = vmatpush1.bf16.msra.mxu0 %v2025
    %2871 = vmatprep.subr.bf16.mxu0 0
    %2872 = vmatpush1.bf16.msra.mxu0 %v2024
    %2873 = vmatprep.subr.bf16.mxu0 0
    %2874 = vmatpush1.bf16.msra.mxu0 %v2023
    %2875 = vmatprep.subr.bf16.mxu0 0
    %2876 = vmatpush1.bf16.msra.mxu0 %v2022
    %2877 = vmatprep.subr.bf16.mxu0 0
    %2878 = vmatpush1.bf16.msra.mxu0 %v2021
    %2879 = vmatprep.subr.bf16.mxu0 0
    %2880 = vmatpush1.bf16.msra.mxu0 %v2020
    %2881 = vmatprep.subr.bf16.mxu0 0
    %2882 = vmatpush1.bf16.msra.mxu0 %v2019
    %2883 = vmatprep.subr.bf16.mxu0 0
    %2884 = vmatpush2.bf16.msra.mxu0 %v2034
    %2885 = vmatprep.subr.bf16.mxu0 0
    %2886 = vmatpush2.bf16.msra.mxu0 %v2033
    %2887 = vmatprep.subr.bf16.mxu0 0
    %2888 = vmatpush2.bf16.msra.mxu0 %v2032
    %2889 = vmatprep.subr.bf16.mxu0 0
    %2890 = vmatpush2.bf16.msra.mxu0 %v2031
    %2891 = vmatprep.subr.bf16.mxu0 0
    %2892 = vmatpush2.bf16.msra.mxu0 %v2030
    %2893 = vmatprep.subr.bf16.mxu0 0
    %2894 = vmatpush2.bf16.msra.mxu0 %v2029
    %2895 = vmatprep.subr.bf16.mxu0 0
    %2896 = vmatpush2.bf16.msra.mxu0 %v2028
    %2897 = vmatprep.subr.bf16.mxu0 0
    %2898 = vmatpush2.bf16.msra.mxu0 %v2027
    %2899 = vmatprep.mubr.bf16.mxu0 %v734
    %2900 = vmatmul.mubr.bf16.gmra.mxu0 %v720
    %v2901 = vpop.f32.mrf.mxu0
    %v2902 = vadd.f32 %v2862, %v2901
    %v2903 = vpop.f32.mrf.mxu0
    %v2904 = vpop.f32.mrf.mxu0
    %v2905 = vpop.f32.mrf.mxu0
    %2906 = vdwg.mxu0
    %2907 = vmatprep.subr.bf16.mxu0 0
    %2908 = vmatpush1.bf16.msra.mxu0 %v2042
    %2909 = vmatprep.subr.bf16.mxu0 0
    %2910 = vmatpush1.bf16.msra.mxu0 %v2041
    %2911 = vmatprep.subr.bf16.mxu0 0
    %2912 = vmatpush1.bf16.msra.mxu0 %v2040
    %2913 = vmatprep.subr.bf16.mxu0 0
    %2914 = vmatpush1.bf16.msra.mxu0 %v2039
    %2915 = vmatprep.subr.bf16.mxu0 0
    %2916 = vmatpush1.bf16.msra.mxu0 %v2038
    %2917 = vmatprep.subr.bf16.mxu0 0
    %2918 = vmatpush1.bf16.msra.mxu0 %v2037
    %2919 = vmatprep.subr.bf16.mxu0 0
    %2920 = vmatpush1.bf16.msra.mxu0 %v2036
    %2921 = vmatprep.subr.bf16.mxu0 0
    %2922 = vmatpush1.bf16.msra.mxu0 %v2035
    %2923 = vmatprep.subr.bf16.mxu0 0
    %2924 = vmatpush2.bf16.msra.mxu0 %v2050
    %2925 = vmatprep.subr.bf16.mxu0 0
    %2926 = vmatpush2.bf16.msra.mxu0 %v2049
    %2927 = vmatprep.subr.bf16.mxu0 0
    %2928 = vmatpush2.bf16.msra.mxu0 %v2048
    %2929 = vmatprep.subr.bf16.mxu0 0
    %2930 = vmatpush2.bf16.msra.mxu0 %v2047
    %2931 = vmatprep.subr.bf16.mxu0 0
    %2932 = vmatpush2.bf16.msra.mxu0 %v2046
    %2933 = vmatprep.subr.bf16.mxu0 0
    %2934 = vmatpush2.bf16.msra.mxu0 %v2045
    %2935 = vmatprep.subr.bf16.mxu0 0
    %2936 = vmatpush2.bf16.msra.mxu0 %v2044
    %2937 = vmatprep.subr.bf16.mxu0 0
    %2938 = vmatpush2.bf16.msra.mxu0 %v2043
    %2939 = vmatprep.mubr.bf16.mxu0 %v738
    %2940 = vmatmul.mubr.bf16.gmra.mxu0 %v736
    %v2941 = vpop.f32.mrf.mxu0
    %v2942 = vadd.f32 %v2902, %v2941
    %v2943 = vpop.f32.mrf.mxu0
    %v2944 = vpop.f32.mrf.mxu0
    %v2945 = vpop.f32.mrf.mxu0
    %2946 = vdwg.mxu0
    %v2947 = vadd.f32 %v22, %v2942
    %vm2948 = vcmask 107520
    %2949 = vst.msk [vmem:[#allocation2] sm:$0x3] %vm2948, %v2947
    // Predicated region
    $region18: #{tpu_custom_call.1} parent=1 // pred_check
      %p2950 = pneg %p16
    $region19: #{tpu_custom_call.1} parent=1 // pred_check_branch
      %2952 = sbr.rel (%p2950) target = $region21
    $region20: #{tpu_custom_call.1} parent=1 // pred_region
      %v2953 = vld [vmem:[#allocation2] sm:$0x3]
      %v2954 = vld [vmem:[%s2] sm:$0x1]
      %v2956 = vlaneseq
      %v2957 = vshrl.u32 %v2956, 7
      %v2958 = vsub.s32 0, %v2957
      %v2959 = vrot.slane %v2954, %v2958
      %v2961 = vadd.f32 %v2953, %v2959
      %v2962 = vsub.f32 0.0, %v2961
      %v2963 = vmul.f32 %v2962, 1.442695
      %v2964 = vpow.pop %v2963
      %v2965 = vadd.f32 %v2964, 1.0
      %v2966 = vrcp.pop %v2965
      %2967 = vst.msk [vmem:[#allocation3] sm:$0x3] %vm2948, %v2966
    $region21: #{tpu_custom_call.1} parent=1 // pred_fallthru
      _
    // Predicated region
    $region22: #{tpu_custom_call.1} parent=1 // pred_check
      _
    $region23: #{tpu_custom_call.1} parent=1 // pred_check_branch
      %2969 = sbr.rel (0) target = $region25
    $region24: #{tpu_custom_call.1} parent=1 // pred_region
      %s2971 = ssub.s32 32, 32
      %2972 = vsyncadd [#allocation4], %s2971
      %s2974 = sshll.u32 [#allocation3], 4
      %s2975 = int_to_ptr.vmem [resolvable:$true] %s2974
      %2977 = dma.vmem_to_hbm [thread:$0]  %s2975, 32, %s3, [#allocation4]
    $region25: #{tpu_custom_call.1} parent=1 // pred_fallthru
      _
    // Predicated region
    $region26: #{tpu_custom_call.1} parent=1 // pred_check
      _
    $region27: #{tpu_custom_call.1} parent=1 // pred_check_branch
      %2979 = sbr.rel (0) target = $region29
    $region28: #{tpu_custom_call.1} parent=1 // pred_region
      %2980 = dma.done [#allocation4], 32
    $region29: #{tpu_custom_call.1} parent=1 // pred_fallthru
      _
    %2981 = vsyncpa [#allocation4], 1

</llo_original>
